<compile_context>
chip_gen: v6e
topology: v6e:2x2x1
jax: 0.10.0
libtpu: 0.0.40
codegen_flags: <defaults>
</compile_context>

<pallas_src>
import jax
import jax.numpy as jnp
from jax import lax
from jax.experimental import pallas as pl
from jax.experimental.pallas import tpu as pltpu

C_IN, C_MID, C_OUT3, C_OUT = 20, 15, 20, 21
_INV_SQRT2 = 0.7071067811865476
MAX_TILE_M = 8192  # lanes per grid step; ~5.5 MiB/step footprint incl. temporaries


def model_kernel(x_ref,
                 w1_ref, b1_ref,
                 w2_ref, b2_ref,
                 w3_ref, b3_ref,
                 w4_ref, b4_ref,
                 o_ref):
    # GELU = (0.5*h) * (erf(h/sqrt(2)) + 1); the 0.5 is folded into w2/w3/w4
    # in the wrapper, so here each activation is just h * (erf(h*c) + 1).
    x = x_ref[...]                                                       # (20, TILE_M)

    # conv1 (1x1): (15,20) @ (20,M) + b(15,1)
    h = jnp.dot(w1_ref[...], x, preferred_element_type=jnp.float32) + b1_ref[...]
    h = h * (lax.erf(h * _INV_SQRT2) + 1.0)

    # conv2 (1x1): (15,15) @ (15,M) + b(15,1)   [w2 pre-scaled by 0.5]
    h = jnp.dot(w2_ref[...], h, preferred_element_type=jnp.float32) + b2_ref[...]
    h = h * (lax.erf(h * _INV_SQRT2) + 1.0)

    # conv3 (1x1): (20,15) @ (15,M) + b(20,1)   [w3 pre-scaled by 0.5]
    h = jnp.dot(w3_ref[...], h, preferred_element_type=jnp.float32) + b3_ref[...]
    h = h * (lax.erf(h * _INV_SQRT2) + 1.0)

    # conv_transpose4 (1x1, stride 1): weight (C_in, C_out) -> (C_out, C_in) @ h
    # [w4 pre-scaled by 0.5]
    h = jnp.dot(w4_ref[...], h, preferred_element_type=jnp.float32) + b4_ref[...]

    o_ref[...] = h.astype(o_ref.dtype)                                   # (21, TILE_M)


@jax.jit
def model_forward(x_nchw, params):
    """x_nchw: (N, 20, H, W) float32 -> (N, 21, H, W) float32."""
    w1, b1, w2, b2, w3, b3, w4, b4 = params
    N, C, H, W = x_nchw.shape
    assert C == C_IN

    M = N * H * W
    m_pad = ((M + 127) // 128) * 128
    tile_m = min(m_pad, MAX_TILE_M)          # lane-dense tile, multiple of 128
    grid_m = pl.cdiv(M, tile_m)              # last block may be ragged (masked store)

    # NCHW -> (C, N*H*W): channels already lead within each image -> cheap.
    # No explicit padding: Pallas masks the ragged last lane tile.
    x_cm = jnp.transpose(x_nchw, (1, 0, 2, 3)).reshape(C_IN, M)

    # Conv2d weights (out,in,1,1) -> (out,in); ConvTranspose2d (in,out,1,1) -> (out,in).
    # Fold each GELU's 0.5 into the consuming layer's weights (exact in f32).
    w1m = w1.reshape(C_MID, C_IN)                            # (15, 20)
    w2m = 0.5 * w2.reshape(C_MID, C_MID)                     # (15, 15)
    w3m = 0.5 * w3.reshape(C_OUT3, C_MID)                    # (20, 15)
    w4m = 0.5 * jnp.transpose(w4.reshape(C_IN, C_OUT))       # (21, 20)

    # Advisory cost hint for XLA's scheduler around this mostly-latency/HBM-bound kernel.
    flops = 2 * M * (C_IN * C_MID + C_MID * C_MID + C_MID * C_OUT3 + C_IN * C_OUT)
    transcendentals = M * (C_MID + C_MID + C_OUT3)           # one erf per activated elem
    bytes_accessed = 4 * (
        C_IN * M + C_OUT * M
        + C_MID * C_IN + C_MID * C_MID + C_OUT3 * C_MID + C_OUT * C_IN
        + C_MID + C_MID + C_OUT3 + C_OUT
    )

    def resident(shape):
        # Whole-array block, constant index_map -> DMA'd once, VMEM-resident.
        return pl.BlockSpec(shape, lambda i: (0, 0))

    out = pl.pallas_call(
        model_kernel,
        out_shape=jax.ShapeDtypeStruct((C_OUT, M), jnp.float32),
        grid=(grid_m,),
        in_specs=[
            pl.BlockSpec((C_IN, tile_m), lambda i: (0, i)),   # activations: tiled on lanes
            resident((C_MID, C_IN)),  resident((C_MID, 1)),
            resident((C_MID, C_MID)), resident((C_MID, 1)),
            resident((C_OUT3, C_MID)), resident((C_OUT3, 1)),
            resident((C_OUT, C_IN)),  resident((C_OUT, 1)),
        ],
        out_specs=pl.BlockSpec((C_OUT, tile_m), lambda i: (0, i)),
        compiler_params=pltpu.CompilerParams(
            dimension_semantics=("parallel",)),               # megacore shard over M (v7x)
        cost_estimate=pl.CostEstimate(flops=flops,
                                      transcendentals=transcendentals,
                                      bytes_accessed=bytes_accessed),
    )(x_cm,
      w1m, b1.reshape(C_MID, 1),
      w2m, b2.reshape(C_MID, 1),
      w3m, b3.reshape(C_OUT3, 1),
      w4m, b4.reshape(C_OUT, 1))

    # (C_OUT, M) -> (C_OUT, N, H, W) -> NCHW with a single cheap transpose.
    out = out.reshape(C_OUT, N, H, W)
    return jnp.transpose(out, (1, 0, 2, 3))


def _reference(x_nchw, params):
    """Pure-JAX reference (original op sequence, no Pallas) for correctness."""
    w1, b1, w2, b2, w3, b3, w4, b4 = params
    x = jnp.transpose(x_nchw, (0, 2, 3, 1))  # NHWC

    def lin(h, wm, b):
        return jnp.einsum('nhwc,cd->nhwd', h, wm) + b

    def gelu(h):
        return (h * 0.5) * (lax.erf(h * _INV_SQRT2) + 1.0)

    h = gelu(lin(x, jnp.transpose(w1.reshape(C_MID, C_IN)), b1))
    h = gelu(lin(h, jnp.transpose(w2.reshape(C_MID, C_MID)), b2))
    h = gelu(lin(h, jnp.transpose(w3.reshape(C_OUT3, C_MID)), b3))
    h = lin(h, w4.reshape(C_IN, C_OUT), b4)
    return jnp.transpose(h, (0, 3, 1, 2))


def init_params(key):
    """Deterministic parameter init mirroring the layer shapes of the module."""
    ks = jax.random.split(key, 8)

    def u(k, shape, fan_in):
        bound = 1.0 / jnp.sqrt(fan_in)
        return jax.random.uniform(k, shape, jnp.float32, -bound, bound)

    w1 = u(ks[0], (C_MID, C_IN, 1, 1), C_IN)     # Conv2d(20, 15, 1)
    b1 = u(ks[1], (C_MID,), C_IN)
    w2 = u(ks[2], (C_MID, C_MID, 1, 1), C_MID)   # Conv2d(15, 15, 1)
    b2 = u(ks[3], (C_MID,), C_MID)
    w3 = u(ks[4], (C_OUT3, C_MID, 1, 1), C_MID)  # Conv2d(15, 20, 1)
    b3 = u(ks[5], (C_OUT3,), C_MID)
    w4 = u(ks[6], (C_IN, C_OUT, 1, 1), C_IN)     # ConvTranspose2d(20, 21, 1)
    b4 = u(ks[7], (C_OUT,), C_IN)
    return (w1, b1, w2, b2, w3, b3, w4, b4)


if __name__ == "__main__":
    key = jax.random.PRNGKey(0)
    kx, kx2, kp = jax.random.split(key, 3)
    params = init_params(kp)

    # Spec shape: matches torch.randn(3, 20, 17, 17) -> single grid step, ragged lanes.
    x1 = jax.random.normal(kx, (3, C_IN, 17, 17), jnp.float32)
    out = jax.block_until_ready(model_forward(x1, params))
    assert out.shape == (3, C_OUT, 17, 17), out.shape
    ref = _reference(x1, params)
    assert jnp.allclose(out, ref, atol=1e-4, rtol=1e-4), "mismatch vs reference (small)"

    # Larger input: exercises the multi-step M grid (grid_m=2) + ragged last block.
    x2 = jax.random.normal(kx2, (2, C_IN, 72, 72), jnp.float32)   # M = 10368 > 8192
    out2 = jax.block_until_ready(model_forward(x2, params))
    assert out2.shape == (2, C_OUT, 72, 72), out2.shape
    ref2 = _reference(x2, params)
    assert jnp.allclose(out2, ref2, atol=1e-4, rtol=1e-4), "mismatch vs reference (tiled)"

    print("KERNEL_OK")
</pallas_src>

<mosaic_0001>
module attributes {stable_mosaic.version = 11 : i64} {
  func.func @model_kernel(%arg0: i32, %arg1: memref<20x896xf32, #tpu.memory_space<vmem>>, %arg2: memref<15x20xf32, #tpu.memory_space<vmem>>, %arg3: memref<15x1xf32, #tpu.memory_space<vmem>>, %arg4: memref<15x15xf32, #tpu.memory_space<vmem>>, %arg5: memref<15x1xf32, #tpu.memory_space<vmem>>, %arg6: memref<20x15xf32, #tpu.memory_space<vmem>>, %arg7: memref<20x1xf32, #tpu.memory_space<vmem>>, %arg8: memref<21x20xf32, #tpu.memory_space<vmem>>, %arg9: memref<21x1xf32, #tpu.memory_space<vmem>>, %arg10: memref<21x896xf32, #tpu.memory_space<vmem>>) attributes {dimension_semantics = [#tpu.dimension_semantics<parallel>], iteration_bounds = array<i64: 1>, scalar_prefetch = 0 : i64, scratch_operands = 0 : i64, tpu.core_type = #tpu.core_type<tc>, window_params = [{transform_indices = @transform_0, window_bounds = array<i64: 20, 896>}, {pipeline_mode = #tpu.pipeline_mode<synchronous>, transform_indices = @transform_1, window_bounds = array<i64: 15, 20>}, {pipeline_mode = #tpu.pipeline_mode<synchronous>, transform_indices = @transform_2, window_bounds = array<i64: 15, 1>}, {pipeline_mode = #tpu.pipeline_mode<synchronous>, transform_indices = @transform_3, window_bounds = array<i64: 15, 15>}, {pipeline_mode = #tpu.pipeline_mode<synchronous>, transform_indices = @transform_4, window_bounds = array<i64: 15, 1>}, {pipeline_mode = #tpu.pipeline_mode<synchronous>, transform_indices = @transform_5, window_bounds = array<i64: 20, 15>}, {pipeline_mode = #tpu.pipeline_mode<synchronous>, transform_indices = @transform_6, window_bounds = array<i64: 20, 1>}, {pipeline_mode = #tpu.pipeline_mode<synchronous>, transform_indices = @transform_7, window_bounds = array<i64: 21, 20>}, {pipeline_mode = #tpu.pipeline_mode<synchronous>, transform_indices = @transform_8, window_bounds = array<i64: 21, 1>}, {transform_indices = @transform_9, window_bounds = array<i64: 21, 896>}]} {
    %c0 = arith.constant 0 : index
    %c0_0 = arith.constant 0 : index
    %0 = vector.load %arg1[%c0, %c0_0] : memref<20x896xf32, #tpu.memory_space<vmem>>, vector<20x896xf32>
    %c0_1 = arith.constant 0 : index
    %c0_2 = arith.constant 0 : index
    %1 = vector.load %arg2[%c0_1, %c0_2] : memref<15x20xf32, #tpu.memory_space<vmem>>, vector<15x20xf32>
    %cst = arith.constant dense<0.000000e+00> : vector<15x896xf32>
    %2 = tpu.matmul %1, %0, %cst {dimension_numbers = #tpu.dot_dimension_numbers<[1], [0], [0], [1], [0, 0, 1, 1], [], []>} : vector<15x20xf32>, vector<20x896xf32>, vector<15x896xf32> -> vector<15x896xf32>
    %c0_3 = arith.constant 0 : index
    %c0_4 = arith.constant 0 : index
    %3 = vector.load %arg3[%c0_3, %c0_4] : memref<15x1xf32, #tpu.memory_space<vmem>>, vector<15x1xf32>
    %4 = vector.broadcast %3 : vector<15x1xf32> to vector<15x896xf32>
    %5 = arith.addf %2, %4 : vector<15x896xf32>
    %cst_5 = arith.constant 0.707106769 : f32
    %6 = vector.broadcast %cst_5 : f32 to vector<15x896xf32>
    %7 = arith.mulf %5, %6 : vector<15x896xf32>
    %8 = math.erf %7 : vector<15x896xf32>
    %cst_6 = arith.constant 1.000000e+00 : f32
    %9 = vector.broadcast %cst_6 : f32 to vector<15x896xf32>
    %10 = arith.addf %8, %9 : vector<15x896xf32>
    %11 = arith.mulf %5, %10 : vector<15x896xf32>
    %c0_7 = arith.constant 0 : index
    %c0_8 = arith.constant 0 : index
    %12 = vector.load %arg4[%c0_7, %c0_8] : memref<15x15xf32, #tpu.memory_space<vmem>>, vector<15x15xf32>
    %cst_9 = arith.constant dense<0.000000e+00> : vector<15x896xf32>
    %13 = tpu.matmul %12, %11, %cst_9 {dimension_numbers = #tpu.dot_dimension_numbers<[1], [0], [0], [1], [0, 0, 1, 1], [], []>} : vector<15x15xf32>, vector<15x896xf32>, vector<15x896xf32> -> vector<15x896xf32>
    %c0_10 = arith.constant 0 : index
    %c0_11 = arith.constant 0 : index
    %14 = vector.load %arg5[%c0_10, %c0_11] : memref<15x1xf32, #tpu.memory_space<vmem>>, vector<15x1xf32>
    %15 = vector.broadcast %14 : vector<15x1xf32> to vector<15x896xf32>
    %16 = arith.addf %13, %15 : vector<15x896xf32>
    %cst_12 = arith.constant 0.707106769 : f32
    %17 = vector.broadcast %cst_12 : f32 to vector<15x896xf32>
    %18 = arith.mulf %16, %17 : vector<15x896xf32>
    %19 = math.erf %18 : vector<15x896xf32>
    %cst_13 = arith.constant 1.000000e+00 : f32
    %20 = vector.broadcast %cst_13 : f32 to vector<15x896xf32>
    %21 = arith.addf %19, %20 : vector<15x896xf32>
    %22 = arith.mulf %16, %21 : vector<15x896xf32>
    %c0_14 = arith.constant 0 : index
    %c0_15 = arith.constant 0 : index
    %23 = vector.load %arg6[%c0_14, %c0_15] : memref<20x15xf32, #tpu.memory_space<vmem>>, vector<20x15xf32>
    %cst_16 = arith.constant dense<0.000000e+00> : vector<20x896xf32>
    %24 = tpu.matmul %23, %22, %cst_16 {dimension_numbers = #tpu.dot_dimension_numbers<[1], [0], [0], [1], [0, 0, 1, 1], [], []>} : vector<20x15xf32>, vector<15x896xf32>, vector<20x896xf32> -> vector<20x896xf32>
    %c0_17 = arith.constant 0 : index
    %c0_18 = arith.constant 0 : index
    %25 = vector.load %arg7[%c0_17, %c0_18] : memref<20x1xf32, #tpu.memory_space<vmem>>, vector<20x1xf32>
    %26 = vector.broadcast %25 : vector<20x1xf32> to vector<20x896xf32>
    %27 = arith.addf %24, %26 : vector<20x896xf32>
    %cst_19 = arith.constant 0.707106769 : f32
    %28 = vector.broadcast %cst_19 : f32 to vector<20x896xf32>
    %29 = arith.mulf %27, %28 : vector<20x896xf32>
    %30 = math.erf %29 : vector<20x896xf32>
    %cst_20 = arith.constant 1.000000e+00 : f32
    %31 = vector.broadcast %cst_20 : f32 to vector<20x896xf32>
    %32 = arith.addf %30, %31 : vector<20x896xf32>
    %33 = arith.mulf %27, %32 : vector<20x896xf32>
    %c0_21 = arith.constant 0 : index
    %c0_22 = arith.constant 0 : index
    %34 = vector.load %arg8[%c0_21, %c0_22] : memref<21x20xf32, #tpu.memory_space<vmem>>, vector<21x20xf32>
    %cst_23 = arith.constant dense<0.000000e+00> : vector<21x896xf32>
    %35 = tpu.matmul %34, %33, %cst_23 {dimension_numbers = #tpu.dot_dimension_numbers<[1], [0], [0], [1], [0, 0, 1, 1], [], []>} : vector<21x20xf32>, vector<20x896xf32>, vector<21x896xf32> -> vector<21x896xf32>
    %c0_24 = arith.constant 0 : index
    %c0_25 = arith.constant 0 : index
    %36 = vector.load %arg9[%c0_24, %c0_25] : memref<21x1xf32, #tpu.memory_space<vmem>>, vector<21x1xf32>
    %37 = vector.broadcast %36 : vector<21x1xf32> to vector<21x896xf32>
    %38 = arith.addf %35, %37 : vector<21x896xf32>
    %c0_26 = arith.constant 0 : index
    %c0_27 = arith.constant 0 : index
    %39 = vector.load %arg10[%c0_26, %c0_27] : memref<21x896xf32, #tpu.memory_space<vmem>>, vector<21x896xf32>
    tpu.vector_store %arg10[%c0_26, %c0_27], %38 {strides = array<i32>} : memref<21x896xf32, #tpu.memory_space<vmem>>, vector<21x896xf32>,
    return
  }
  func.func @transform_0(%arg0: i32) -> (i32, i32) {
    %c0_i32 = arith.constant 0 : i32
    %c0_i32_0 = arith.constant 0 : i32
    return %c0_i32, %arg0 : i32, i32
  }
  func.func @transform_1(%arg0: i32) -> (i32, i32) {
    %c0_i32 = arith.constant 0 : i32
    %c0_i32_0 = arith.constant 0 : i32
    %c0_i32_1 = arith.constant 0 : i32
    return %c0_i32, %c0_i32_0 : i32, i32
  }
  func.func @transform_2(%arg0: i32) -> (i32, i32) {
    %c0_i32 = arith.constant 0 : i32
    %c0_i32_0 = arith.constant 0 : i32
    %c0_i32_1 = arith.constant 0 : i32
    return %c0_i32, %c0_i32_0 : i32, i32
  }
  func.func @transform_3(%arg0: i32) -> (i32, i32) {
    %c0_i32 = arith.constant 0 : i32
    %c0_i32_0 = arith.constant 0 : i32
    %c0_i32_1 = arith.constant 0 : i32
    return %c0_i32, %c0_i32_0 : i32, i32
  }
  func.func @transform_4(%arg0: i32) -> (i32, i32) {
    %c0_i32 = arith.constant 0 : i32
    %c0_i32_0 = arith.constant 0 : i32
    %c0_i32_1 = arith.constant 0 : i32
    return %c0_i32, %c0_i32_0 : i32, i32
  }
  func.func @transform_5(%arg0: i32) -> (i32, i32) {
    %c0_i32 = arith.constant 0 : i32
    %c0_i32_0 = arith.constant 0 : i32
    %c0_i32_1 = arith.constant 0 : i32
    return %c0_i32, %c0_i32_0 : i32, i32
  }
  func.func @transform_6(%arg0: i32) -> (i32, i32) {
    %c0_i32 = arith.constant 0 : i32
    %c0_i32_0 = arith.constant 0 : i32
    %c0_i32_1 = arith.constant 0 : i32
    return %c0_i32, %c0_i32_0 : i32, i32
  }
  func.func @transform_7(%arg0: i32) -> (i32, i32) {
    %c0_i32 = arith.constant 0 : i32
    %c0_i32_0 = arith.constant 0 : i32
    %c0_i32_1 = arith.constant 0 : i32
    return %c0_i32, %c0_i32_0 : i32, i32
  }
  func.func @transform_8(%arg0: i32) -> (i32, i32) {
    %c0_i32 = arith.constant 0 : i32
    %c0_i32_0 = arith.constant 0 : i32
    %c0_i32_1 = arith.constant 0 : i32
    return %c0_i32, %c0_i32_0 : i32, i32
  }
  func.func @transform_9(%arg0: i32) -> (i32, i32) {
    %c0_i32 = arith.constant 0 : i32
    %c0_i32_0 = arith.constant 0 : i32
    return %c0_i32, %arg0 : i32, i32
  }
}

</mosaic_0001>

<llo_original>
// kernel: model_forward.1
$region0: #{model_forward.1}
  #allocation0 [shape = 'u32[]', space=smem, size = 0x4, offset = 0x4, fixed_abs, tag = 'smem constant byte address 0x4 - core index']
  #allocation1 [shape = 'u32[144,128]{1,0:T(1,128)}', space=vmem, size = 0x12000, scoped, tag = 'internal scratch']
  %s0 = inlined_call_operand.vmem [shape: f32[20,867], index: 0, kind: input, shape index: {}]
  %s1 = inlined_call_operand.vmem [shape: f32[15,20], index: 1, kind: input, shape index: {}]
  %s2 = inlined_call_operand.vmem [shape: f32[15,1], index: 2, kind: input, shape index: {}]
  %s3 = inlined_call_operand.vmem [shape: f32[15,15], index: 3, kind: input, shape index: {}]
  %s4 = inlined_call_operand.vmem [shape: f32[15,1], index: 4, kind: input, shape index: {}]
  %s5 = inlined_call_operand.vmem [shape: f32[20,15], index: 5, kind: input, shape index: {}]
  %s6 = inlined_call_operand.vmem [shape: f32[20,1], index: 6, kind: input, shape index: {}]
  %s7 = inlined_call_operand.vmem [shape: f32[21,20], index: 7, kind: input, shape index: {}]
  %s8 = inlined_call_operand.vmem [shape: f32[21,1], index: 8, kind: input, shape index: {}]
  %s9 = inlined_call_operand.vmem [shape: f32[21,867], index: 9, kind: output, shape index: {}]
  %s10 = sld [smem:[#allocation0]]
  $region46: #{model_forward.1} parent=0
    _
  %s12 = ssub.s32 1, %s10
  %s13 = scalar_select 0, %s12, %s10
  // Predicated region
  $region2: #{model_forward.1} parent=0 // pred_check
    _
  $region3: #{model_forward.1} parent=0 // pred_check_branch
    %15 = sbr.rel (0) target = $region5
  $region4: #{model_forward.1} parent=0 // pred_region
    _
  $region5: #{model_forward.1} parent=0 // pred_fallthru
    _
  // Predicated region
  $region6: #{model_forward.1} parent=0 // pred_check
    _
  $region7: #{model_forward.1} parent=0 // pred_check_branch
    %17 = sbr.rel (0) target = $region9
  $region8: #{model_forward.1} parent=0 // pred_region
    _
  $region9: #{model_forward.1} parent=0 // pred_fallthru
    _
  // Predicated region
  $region10: #{model_forward.1} parent=0 // pred_check
    _
  $region11: #{model_forward.1} parent=0 // pred_check_branch
    %19 = sbr.rel (0) target = $region13
  $region12: #{model_forward.1} parent=0 // pred_region
    _
  $region13: #{model_forward.1} parent=0 // pred_fallthru
    _
  // Predicated region
  $region14: #{model_forward.1} parent=0 // pred_check
    _
  $region15: #{model_forward.1} parent=0 // pred_check_branch
    %21 = sbr.rel (0) target = $region17
  $region16: #{model_forward.1} parent=0 // pred_region
    _
  $region17: #{model_forward.1} parent=0 // pred_fallthru
    _
  // Predicated region
  $region18: #{model_forward.1} parent=0 // pred_check
    _
  $region19: #{model_forward.1} parent=0 // pred_check_branch
    %23 = sbr.rel (0) target = $region21
  $region20: #{model_forward.1} parent=0 // pred_region
    _
  $region21: #{model_forward.1} parent=0 // pred_fallthru
    _
  // Predicated region
  $region22: #{model_forward.1} parent=0 // pred_check
    _
  $region23: #{model_forward.1} parent=0 // pred_check_branch
    %25 = sbr.rel (0) target = $region25
  $region24: #{model_forward.1} parent=0 // pred_region
    _
  $region25: #{model_forward.1} parent=0 // pred_fallthru
    _
  // Predicated region
  $region26: #{model_forward.1} parent=0 // pred_check
    _
  $region27: #{model_forward.1} parent=0 // pred_check_branch
    %27 = sbr.rel (0) target = $region29
  $region28: #{model_forward.1} parent=0 // pred_region
    _
  $region29: #{model_forward.1} parent=0 // pred_fallthru
    _
  // Predicated region
  $region30: #{model_forward.1} parent=0 // pred_check
    _
  $region31: #{model_forward.1} parent=0 // pred_check_branch
    %29 = sbr.rel (0) target = $region33
  $region32: #{model_forward.1} parent=0 // pred_region
    _
  $region33: #{model_forward.1} parent=0 // pred_fallthru
    _
  // Predicated region
  $region34: #{model_forward.1} parent=0 // pred_check
    _
  $region35: #{model_forward.1} parent=0 // pred_check_branch
    %31 = sbr.rel (0) target = $region37
  $region36: #{model_forward.1} parent=0 // pred_region
    _
  $region37: #{model_forward.1} parent=0 // pred_fallthru
    _
  %v32 = vld [vmem:[%s0] sm:$0xff]
  %v33 = vld [vmem:[%s0 + $0x8] sm:$0xff]
  %v34 = vld [vmem:[%s0 + $0x10] sm:$0xff]
  %v35 = vld [vmem:[%s0 + $0x18] sm:$0xff]
  %v36 = vld [vmem:[%s0 + $0x20] sm:$0xff]
  %v37 = vld [vmem:[%s0 + $0x28] sm:$0xff]
  %v38 = vld [vmem:[%s0 + $0x30] sm:$0xff]
  %v39 = vld [vmem:[%s0 + $0x38] sm:$0xff]
  %v40 = vld [vmem:[%s0 + $0x40] sm:$0xff]
  %v41 = vld [vmem:[%s0 + $0x48] sm:$0xff]
  %v42 = vld [vmem:[%s0 + $0x50] sm:$0xff]
  %v43 = vld [vmem:[%s0 + $0x58] sm:$0xff]
  %v44 = vld [vmem:[%s0 + $0x60] sm:$0xff]
  %v45 = vld [vmem:[%s0 + $0x68] sm:$0xff]
  %v46 = vld [vmem:[%s0 + $0x70] sm:$0xf]
  %v47 = vld [vmem:[%s0 + $0x78] sm:$0xf]
  %v48 = vld [vmem:[%s0 + $0x80] sm:$0xf]
  %v49 = vld [vmem:[%s0 + $0x88] sm:$0xf]
  %v50 = vld [vmem:[%s0 + $0x90] sm:$0xf]
  %v51 = vld [vmem:[%s0 + $0x98] sm:$0xf]
  %v52 = vld [vmem:[%s0 + $0xa0] sm:$0xf]
  %v53 = vld [vmem:[%s1] sm:$0xff]
  %v54 = vld [vmem:[%s1 + $0x8] sm:$0x7f]
  %v55 = vld [vmem:[%s2] sm:$0xff]
  %v56 = vld [vmem:[%s2 + $0x8] sm:$0x7f]
  %58 = vset.pattern.permute.xlu0 0
  %59 = vperm.xlu0 %58, %v55
  %v60 = vpop.permute.xlu0 %59
  %63 = vset.pattern.permute.xlu0 0
  %64 = vperm.xlu0 %63, %v56
  %v65 = vpop.permute.xlu0 %64
  %vm67 = vcmask 162816
  %v69 = vsel %vm67, %v53, 0
  %v72 = vsel %vm67, %v54, 0
  %vm74 = vcmask 1043456
  %v76 = vsel %vm74, %v46, 0
  %v79 = vsel %vm74, %v47, 0
  %v82 = vsel %vm74, %v48, 0
  %v85 = vsel %vm74, %v49, 0
  %v88 = vsel %vm74, %v50, 0
  %v91 = vsel %vm74, %v51, 0
  %v94 = vsel %vm74, %v52, 0
  %96 = vmatprep.subr.mxu0 0.0
  %97 = vmatpush1.msra.mxu0 0.0
  %98 = vmatprep.subr.mxu0 0.0
  %99 = vmatpush1.msra.mxu0 0.0
  %100 = vmatprep.subr.mxu0 0.0
  %101 = vmatpush1.msra.mxu0 0.0
  %102 = vmatprep.subr.mxu0 0.0
  %103 = vmatpush1.msra.mxu0 0.0
  %104 = vmatprep.subr.mxu0 0.0
  %105 = vmatpush1.msra.mxu0 0.0
  %106 = vmatprep.subr.mxu0 0.0
  %107 = vmatpush1.msra.mxu0 0.0
  %108 = vmatprep.subr.mxu0 0.0
  %109 = vmatpush1.msra.mxu0 0.0
  %110 = vmatprep.subr.mxu0 0.0
  %111 = vmatpush1.msra.mxu0 0.0
  %112 = vmatprep.subr.mxu0 0.0
  %113 = vmatpush1.msra.mxu0 0.0
  %114 = vmatprep.subr.mxu0 0.0
  %115 = vmatpush1.msra.mxu0 0.0
  %116 = vmatprep.subr.mxu0 0.0
  %117 = vmatpush1.msra.mxu0 0.0
  %118 = vmatprep.subr.mxu0 0.0
  %119 = vmatpush1.msra.mxu0 0.0
  %120 = vmatprep.subr.mxu0 0.0
  %121 = vmatpush1.msra.mxu0 0.0
  %122 = vmatprep.subr.mxu0 %v79
  %123 = vmatpush1.msra.mxu0 %v76
  %124 = vmatprep.subr.mxu0 %v40
  %125 = vmatpush1.msra.mxu0 %v39
  %126 = vmatprep.subr.mxu0 %v33
  %127 = vmatpush1.msra.mxu0 %v32
  %128 = vmatprep.subr.mxu0 0.0
  %129 = vmatpush2.msra.mxu0 0.0
  %130 = vmatprep.subr.mxu0 0.0
  %131 = vmatpush2.msra.mxu0 0.0
  %132 = vmatprep.subr.mxu0 0.0
  %133 = vmatpush2.msra.mxu0 0.0
  %134 = vmatprep.subr.mxu0 0.0
  %135 = vmatpush2.msra.mxu0 0.0
  %136 = vmatprep.subr.mxu0 0.0
  %137 = vmatpush2.msra.mxu0 0.0
  %138 = vmatprep.subr.mxu0 0.0
  %139 = vmatpush2.msra.mxu0 0.0
  %140 = vmatprep.subr.mxu0 0.0
  %141 = vmatpush2.msra.mxu0 0.0
  %142 = vmatprep.subr.mxu0 0.0
  %143 = vmatpush2.msra.mxu0 0.0
  %144 = vmatprep.subr.mxu0 0.0
  %145 = vmatpush2.msra.mxu0 0.0
  %146 = vmatprep.subr.mxu0 0.0
  %147 = vmatpush2.msra.mxu0 0.0
  %148 = vmatprep.subr.mxu0 0.0
  %149 = vmatpush2.msra.mxu0 0.0
  %150 = vmatprep.subr.mxu0 0.0
  %151 = vmatpush2.msra.mxu0 0.0
  %152 = vmatprep.subr.mxu0 0.0
  %153 = vmatpush2.msra.mxu0 0.0
  %154 = vmatprep.subr.mxu0 0.0
  %155 = vmatpush2.msra.mxu0 0.0
  %156 = vmatprep.subr.mxu0 0.0
  %157 = vmatpush2.msra.mxu0 0.0
  %158 = vmatprep.subr.mxu0 0.0
  %159 = vmatpush2.msra.mxu0 0.0
  %160 = vmatprep.mubr.f32.mxu0 0.0
  %161 = vmatmul.mubr.f32.gmra.mxu0 %v69
  %v162 = vpop.f32.mrf.mxu0
  %v163 = vadd.f32 %v60, %v162
  %v164 = vpop.f32.mrf.mxu0
  %v165 = vadd.f32 %v60, %v164
  %166 = vmatprep.mubr.f32.mxu0 0.0
  %167 = vmatmul.mubr.f32.gmra.mxu0 %v72
  %v168 = vpop.f32.mrf.mxu0
  %v169 = vadd.f32 %v65, %v168
  %v170 = vpop.f32.mrf.mxu0
  %v171 = vadd.f32 %v65, %v170
  %172 = vdwg.mxu0
  %173 = vmatprep.subr.mxu0 0.0
  %174 = vmatpush1.msra.mxu0 0.0
  %175 = vmatprep.subr.mxu0 0.0
  %176 = vmatpush1.msra.mxu0 0.0
  %177 = vmatprep.subr.mxu0 0.0
  %178 = vmatpush1.msra.mxu0 0.0
  %179 = vmatprep.subr.mxu0 0.0
  %180 = vmatpush1.msra.mxu0 0.0
  %181 = vmatprep.subr.mxu0 0.0
  %182 = vmatpush1.msra.mxu0 0.0
  %183 = vmatprep.subr.mxu0 0.0
  %184 = vmatpush1.msra.mxu0 0.0
  %185 = vmatprep.subr.mxu0 0.0
  %186 = vmatpush1.msra.mxu0 0.0
  %187 = vmatprep.subr.mxu0 0.0
  %188 = vmatpush1.msra.mxu0 0.0
  %189 = vmatprep.subr.mxu0 0.0
  %190 = vmatpush1.msra.mxu0 0.0
  %191 = vmatprep.subr.mxu0 0.0
  %192 = vmatpush1.msra.mxu0 0.0
  %193 = vmatprep.subr.mxu0 0.0
  %194 = vmatpush1.msra.mxu0 0.0
  %195 = vmatprep.subr.mxu0 0.0
  %196 = vmatpush1.msra.mxu0 0.0
  %197 = vmatprep.subr.mxu0 0.0
  %198 = vmatpush1.msra.mxu0 0.0
  %199 = vmatprep.subr.mxu0 %v85
  %200 = vmatpush1.msra.mxu0 %v82
  %201 = vmatprep.subr.mxu0 %v42
  %202 = vmatpush1.msra.mxu0 %v41
  %203 = vmatprep.subr.mxu0 %v35
  %204 = vmatpush1.msra.mxu0 %v34
  %205 = vmatprep.subr.mxu0 0.0
  %206 = vmatpush2.msra.mxu0 0.0
  %207 = vmatprep.subr.mxu0 0.0
  %208 = vmatpush2.msra.mxu0 0.0
  %209 = vmatprep.subr.mxu0 0.0
  %210 = vmatpush2.msra.mxu0 0.0
  %211 = vmatprep.subr.mxu0 0.0
  %212 = vmatpush2.msra.mxu0 0.0
  %213 = vmatprep.subr.mxu0 0.0
  %214 = vmatpush2.msra.mxu0 0.0
  %215 = vmatprep.subr.mxu0 0.0
  %216 = vmatpush2.msra.mxu0 0.0
  %217 = vmatprep.subr.mxu0 0.0
  %218 = vmatpush2.msra.mxu0 0.0
  %219 = vmatprep.subr.mxu0 0.0
  %220 = vmatpush2.msra.mxu0 0.0
  %221 = vmatprep.subr.mxu0 0.0
  %222 = vmatpush2.msra.mxu0 0.0
  %223 = vmatprep.subr.mxu0 0.0
  %224 = vmatpush2.msra.mxu0 0.0
  %225 = vmatprep.subr.mxu0 0.0
  %226 = vmatpush2.msra.mxu0 0.0
  %227 = vmatprep.subr.mxu0 0.0
  %228 = vmatpush2.msra.mxu0 0.0
  %229 = vmatprep.subr.mxu0 0.0
  %230 = vmatpush2.msra.mxu0 0.0
  %231 = vmatprep.subr.mxu0 0.0
  %232 = vmatpush2.msra.mxu0 0.0
  %233 = vmatprep.subr.mxu0 0.0
  %234 = vmatpush2.msra.mxu0 0.0
  %235 = vmatprep.subr.mxu0 0.0
  %236 = vmatpush2.msra.mxu0 0.0
  %237 = vmatprep.mubr.f32.mxu0 0.0
  %238 = vmatmul.mubr.f32.gmra.mxu0 %v69
  %v239 = vpop.f32.mrf.mxu0
  %v240 = vadd.f32 %v60, %v239
  %v241 = vpop.f32.mrf.mxu0
  %v242 = vadd.f32 %v60, %v241
  %243 = vmatprep.mubr.f32.mxu0 0.0
  %244 = vmatmul.mubr.f32.gmra.mxu0 %v72
  %v245 = vpop.f32.mrf.mxu0
  %v246 = vadd.f32 %v65, %v245
  %v247 = vpop.f32.mrf.mxu0
  %v248 = vadd.f32 %v65, %v247
  %249 = vdwg.mxu0
  %250 = vmatprep.subr.mxu0 0.0
  %251 = vmatpush1.msra.mxu0 0.0
  %252 = vmatprep.subr.mxu0 0.0
  %253 = vmatpush1.msra.mxu0 0.0
  %254 = vmatprep.subr.mxu0 0.0
  %255 = vmatpush1.msra.mxu0 0.0
  %256 = vmatprep.subr.mxu0 0.0
  %257 = vmatpush1.msra.mxu0 0.0
  %258 = vmatprep.subr.mxu0 0.0
  %259 = vmatpush1.msra.mxu0 0.0
  %260 = vmatprep.subr.mxu0 0.0
  %261 = vmatpush1.msra.mxu0 0.0
  %262 = vmatprep.subr.mxu0 0.0
  %263 = vmatpush1.msra.mxu0 0.0
  %264 = vmatprep.subr.mxu0 0.0
  %265 = vmatpush1.msra.mxu0 0.0
  %266 = vmatprep.subr.mxu0 0.0
  %267 = vmatpush1.msra.mxu0 0.0
  %268 = vmatprep.subr.mxu0 0.0
  %269 = vmatpush1.msra.mxu0 0.0
  %270 = vmatprep.subr.mxu0 0.0
  %271 = vmatpush1.msra.mxu0 0.0
  %272 = vmatprep.subr.mxu0 0.0
  %273 = vmatpush1.msra.mxu0 0.0
  %274 = vmatprep.subr.mxu0 0.0
  %275 = vmatpush1.msra.mxu0 0.0
  %276 = vmatprep.subr.mxu0 %v91
  %277 = vmatpush1.msra.mxu0 %v88
  %278 = vmatprep.subr.mxu0 %v44
  %279 = vmatpush1.msra.mxu0 %v43
  %280 = vmatprep.subr.mxu0 %v37
  %281 = vmatpush1.msra.mxu0 %v36
  %282 = vmatprep.subr.mxu0 0.0
  %283 = vmatpush2.msra.mxu0 0.0
  %284 = vmatprep.subr.mxu0 0.0
  %285 = vmatpush2.msra.mxu0 0.0
  %286 = vmatprep.subr.mxu0 0.0
  %287 = vmatpush2.msra.mxu0 0.0
  %288 = vmatprep.subr.mxu0 0.0
  %289 = vmatpush2.msra.mxu0 0.0
  %290 = vmatprep.subr.mxu0 0.0
  %291 = vmatpush2.msra.mxu0 0.0
  %292 = vmatprep.subr.mxu0 0.0
  %293 = vmatpush2.msra.mxu0 0.0
  %294 = vmatprep.subr.mxu0 0.0
  %295 = vmatpush2.msra.mxu0 0.0
  %296 = vmatprep.subr.mxu0 0.0
  %297 = vmatpush2.msra.mxu0 0.0
  %298 = vmatprep.subr.mxu0 0.0
  %299 = vmatpush2.msra.mxu0 0.0
  %300 = vmatprep.subr.mxu0 0.0
  %301 = vmatpush2.msra.mxu0 0.0
  %302 = vmatprep.subr.mxu0 0.0
  %303 = vmatpush2.msra.mxu0 0.0
  %304 = vmatprep.subr.mxu0 0.0
  %305 = vmatpush2.msra.mxu0 0.0
  %306 = vmatprep.subr.mxu0 0.0
  %307 = vmatpush2.msra.mxu0 0.0
  %308 = vmatprep.subr.mxu0 0.0
  %309 = vmatpush2.msra.mxu0 0.0
  %310 = vmatprep.subr.mxu0 0.0
  %311 = vmatpush2.msra.mxu0 0.0
  %312 = vmatprep.subr.mxu0 0.0
  %313 = vmatpush2.msra.mxu0 0.0
  %314 = vmatprep.mubr.f32.mxu0 0.0
  %315 = vmatmul.mubr.f32.gmra.mxu0 %v69
  %v316 = vpop.f32.mrf.mxu0
  %v317 = vadd.f32 %v60, %v316
  %v318 = vpop.f32.mrf.mxu0
  %v319 = vadd.f32 %v60, %v318
  %320 = vmatprep.mubr.f32.mxu0 0.0
  %321 = vmatmul.mubr.f32.gmra.mxu0 %v72
  %v322 = vpop.f32.mrf.mxu0
  %v323 = vadd.f32 %v65, %v322
  %v324 = vpop.f32.mrf.mxu0
  %v325 = vadd.f32 %v65, %v324
  %326 = vdwg.mxu0
  %327 = vmatprep.subr.mxu0 0.0
  %328 = vmatpush1.msra.mxu0 0.0
  %329 = vmatprep.subr.mxu0 0.0
  %330 = vmatpush1.msra.mxu0 0.0
  %331 = vmatprep.subr.mxu0 0.0
  %332 = vmatpush1.msra.mxu0 0.0
  %333 = vmatprep.subr.mxu0 0.0
  %334 = vmatpush1.msra.mxu0 0.0
  %335 = vmatprep.subr.mxu0 0.0
  %336 = vmatpush1.msra.mxu0 0.0
  %337 = vmatprep.subr.mxu0 0.0
  %338 = vmatpush1.msra.mxu0 0.0
  %339 = vmatprep.subr.mxu0 0.0
  %340 = vmatpush1.msra.mxu0 0.0
  %341 = vmatprep.subr.mxu0 0.0
  %342 = vmatpush1.msra.mxu0 0.0
  %343 = vmatprep.subr.mxu0 0.0
  %344 = vmatpush1.msra.mxu0 0.0
  %345 = vmatprep.subr.mxu0 0.0
  %346 = vmatpush1.msra.mxu0 0.0
  %347 = vmatprep.subr.mxu0 0.0
  %348 = vmatpush1.msra.mxu0 0.0
  %349 = vmatprep.subr.mxu0 0.0
  %350 = vmatpush1.msra.mxu0 0.0
  %351 = vmatprep.subr.mxu0 0.0
  %352 = vmatpush1.msra.mxu0 0.0
  %353 = vmatprep.subr.mxu0 0.0
  %354 = vmatpush1.msra.mxu0 %v94
  %355 = vmatprep.subr.mxu0 0.0
  %356 = vmatpush1.msra.mxu0 %v45
  %357 = vmatprep.subr.mxu0 0.0
  %358 = vmatpush1.msra.mxu0 %v38
  %359 = vmatprep.subr.mxu0 0.0
  %360 = vmatpush2.msra.mxu0 0.0
  %361 = vmatprep.subr.mxu0 0.0
  %362 = vmatpush2.msra.mxu0 0.0
  %363 = vmatprep.subr.mxu0 0.0
  %364 = vmatpush2.msra.mxu0 0.0
  %365 = vmatprep.subr.mxu0 0.0
  %366 = vmatpush2.msra.mxu0 0.0
  %367 = vmatprep.subr.mxu0 0.0
  %368 = vmatpush2.msra.mxu0 0.0
  %369 = vmatprep.subr.mxu0 0.0
  %370 = vmatpush2.msra.mxu0 0.0
  %371 = vmatprep.subr.mxu0 0.0
  %372 = vmatpush2.msra.mxu0 0.0
  %373 = vmatprep.subr.mxu0 0.0
  %374 = vmatpush2.msra.mxu0 0.0
  %375 = vmatprep.subr.mxu0 0.0
  %376 = vmatpush2.msra.mxu0 0.0
  %377 = vmatprep.subr.mxu0 0.0
  %378 = vmatpush2.msra.mxu0 0.0
  %379 = vmatprep.subr.mxu0 0.0
  %380 = vmatpush2.msra.mxu0 0.0
  %381 = vmatprep.subr.mxu0 0.0
  %382 = vmatpush2.msra.mxu0 0.0
  %383 = vmatprep.subr.mxu0 0.0
  %384 = vmatpush2.msra.mxu0 0.0
  %385 = vmatprep.subr.mxu0 0.0
  %386 = vmatpush2.msra.mxu0 0.0
  %387 = vmatprep.subr.mxu0 0.0
  %388 = vmatpush2.msra.mxu0 0.0
  %389 = vmatprep.subr.mxu0 0.0
  %390 = vmatpush2.msra.mxu0 0.0
  %391 = vmatprep.mubr.f32.mxu0 0.0
  %392 = vmatmul.mubr.f32.gmra.mxu0 %v69
  %v393 = vpop.f32.mrf.mxu0
  %v394 = vadd.f32 %v60, %v393
  %v395 = vpop.f32.mrf.mxu0
  %396 = vmatprep.mubr.f32.mxu0 0.0
  %397 = vmatmul.mubr.f32.gmra.mxu0 %v72
  %v398 = vpop.f32.mrf.mxu0
  %v399 = vadd.f32 %v65, %v398
  %v400 = vpop.f32.mrf.mxu0
  %401 = vdwg.mxu0
  %v402 = vmul.f32 %v163, 0.70710677
  %v403 = vmul.f32 %v165, 0.70710677
  %v404 = vmul.f32 %v240, 0.70710677
  %v405 = vmul.f32 %v242, 0.70710677
  %v406 = vmul.f32 %v317, 0.70710677
  %v407 = vmul.f32 %v319, 0.70710677
  %v408 = vmul.f32 %v394, 0.70710677
  %v409 = vmul.f32 %v169, 0.70710677
  %v410 = vmul.f32 %v171, 0.70710677
  %v411 = vmul.f32 %v246, 0.70710677
  %v412 = vmul.f32 %v248, 0.70710677
  %v413 = vmul.f32 %v323, 0.70710677
  %v414 = vmul.f32 %v325, 0.70710677
  %v415 = vmul.f32 %v399, 0.70710677
  %v416 = verf.f32.pop %v402
  %v417 = verf.f32.pop %v403
  %v418 = verf.f32.pop %v404
  %v419 = verf.f32.pop %v405
  %v420 = verf.f32.pop %v406
  %v421 = verf.f32.pop %v407
  %v422 = verf.f32.pop %v408
  %v423 = verf.f32.pop %v409
  %v424 = verf.f32.pop %v410
  %v425 = verf.f32.pop %v411
  %v426 = verf.f32.pop %v412
  %v427 = verf.f32.pop %v413
  %v428 = verf.f32.pop %v414
  %v429 = verf.f32.pop %v415
  %v430 = vadd.f32 %v416, 1.0
  %v431 = vadd.f32 %v417, 1.0
  %v432 = vadd.f32 %v418, 1.0
  %v433 = vadd.f32 %v419, 1.0
  %v434 = vadd.f32 %v420, 1.0
  %v435 = vadd.f32 %v421, 1.0
  %v436 = vadd.f32 %v422, 1.0
  %v437 = vadd.f32 %v423, 1.0
  %v438 = vadd.f32 %v424, 1.0
  %v439 = vadd.f32 %v425, 1.0
  %v440 = vadd.f32 %v426, 1.0
  %v441 = vadd.f32 %v427, 1.0
  %v442 = vadd.f32 %v428, 1.0
  %v443 = vadd.f32 %v429, 1.0
  %v444 = vmul.f32 %v163, %v430
  %v445 = vmul.f32 %v165, %v431
  %v446 = vmul.f32 %v240, %v432
  %v447 = vmul.f32 %v242, %v433
  %v448 = vmul.f32 %v317, %v434
  %v449 = vmul.f32 %v319, %v435
  %v450 = vmul.f32 %v394, %v436
  %v451 = vmul.f32 %v169, %v437
  %v452 = vmul.f32 %v171, %v438
  %v453 = vmul.f32 %v246, %v439
  %v454 = vmul.f32 %v248, %v440
  %v455 = vmul.f32 %v323, %v441
  %v456 = vmul.f32 %v325, %v442
  %v457 = vmul.f32 %v399, %v443
  %v458 = vld [vmem:[%s3] sm:$0xff]
  %v459 = vld [vmem:[%s3 + $0x8] sm:$0x7f]
  %v460 = vld [vmem:[%s4] sm:$0xff]
  %v461 = vld [vmem:[%s4 + $0x8] sm:$0x7f]
  %463 = vset.pattern.permute.xlu0 0
  %464 = vperm.xlu0 %463, %v460
  %v465 = vpop.permute.xlu0 %464
  %468 = vset.pattern.permute.xlu0 0
  %469 = vperm.xlu0 %468, %v461
  %v470 = vpop.permute.xlu0 %469
  %vm472 = vcmask 121856
  %v474 = vsel %vm472, %v458, 0
  %v477 = vsel %vm472, %v459, 0
  %vm479 = vcmask 1046528
  %v481 = vsel %vm479, %v451, 0
  %v484 = vsel %vm479, %v452, 0
  %v487 = vsel %vm479, %v453, 0
  %v490 = vsel %vm479, %v454, 0
  %v493 = vsel %vm479, %v455, 0
  %v496 = vsel %vm479, %v456, 0
  %v499 = vsel %vm479, %v457, 0
  %501 = vmatprep.subr.mxu0 0.0
  %502 = vmatpush1.msra.mxu0 0.0
  %503 = vmatprep.subr.mxu0 0.0
  %504 = vmatpush1.msra.mxu0 0.0
  %505 = vmatprep.subr.mxu0 0.0
  %506 = vmatpush1.msra.mxu0 0.0
  %507 = vmatprep.subr.mxu0 0.0
  %508 = vmatpush1.msra.mxu0 0.0
  %509 = vmatprep.subr.mxu0 0.0
  %510 = vmatpush1.msra.mxu0 0.0
  %511 = vmatprep.subr.mxu0 0.0
  %512 = vmatpush1.msra.mxu0 0.0
  %513 = vmatprep.subr.mxu0 0.0
  %514 = vmatpush1.msra.mxu0 0.0
  %515 = vmatprep.subr.mxu0 0.0
  %516 = vmatpush1.msra.mxu0 0.0
  %517 = vmatprep.subr.mxu0 0.0
  %518 = vmatpush1.msra.mxu0 0.0
  %519 = vmatprep.subr.mxu0 0.0
  %520 = vmatpush1.msra.mxu0 0.0
  %521 = vmatprep.subr.mxu0 0.0
  %522 = vmatpush1.msra.mxu0 0.0
  %523 = vmatprep.subr.mxu0 0.0
  %524 = vmatpush1.msra.mxu0 0.0
  %525 = vmatprep.subr.mxu0 0.0
  %526 = vmatpush1.msra.mxu0 0.0
  %527 = vmatprep.subr.mxu0 0.0
  %528 = vmatpush1.msra.mxu0 0.0
  %529 = vmatprep.subr.mxu0 %v484
  %530 = vmatpush1.msra.mxu0 %v481
  %531 = vmatprep.subr.mxu0 %v445
  %532 = vmatpush1.msra.mxu0 %v444
  %533 = vmatprep.subr.mxu0 0.0
  %534 = vmatpush2.msra.mxu0 0.0
  %535 = vmatprep.subr.mxu0 0.0
  %536 = vmatpush2.msra.mxu0 0.0
  %537 = vmatprep.subr.mxu0 0.0
  %538 = vmatpush2.msra.mxu0 0.0
  %539 = vmatprep.subr.mxu0 0.0
  %540 = vmatpush2.msra.mxu0 0.0
  %541 = vmatprep.subr.mxu0 0.0
  %542 = vmatpush2.msra.mxu0 0.0
  %543 = vmatprep.subr.mxu0 0.0
  %544 = vmatpush2.msra.mxu0 0.0
  %545 = vmatprep.subr.mxu0 0.0
  %546 = vmatpush2.msra.mxu0 0.0
  %547 = vmatprep.subr.mxu0 0.0
  %548 = vmatpush2.msra.mxu0 0.0
  %549 = vmatprep.subr.mxu0 0.0
  %550 = vmatpush2.msra.mxu0 0.0
  %551 = vmatprep.subr.mxu0 0.0
  %552 = vmatpush2.msra.mxu0 0.0
  %553 = vmatprep.subr.mxu0 0.0
  %554 = vmatpush2.msra.mxu0 0.0
  %555 = vmatprep.subr.mxu0 0.0
  %556 = vmatpush2.msra.mxu0 0.0
  %557 = vmatprep.subr.mxu0 0.0
  %558 = vmatpush2.msra.mxu0 0.0
  %559 = vmatprep.subr.mxu0 0.0
  %560 = vmatpush2.msra.mxu0 0.0
  %561 = vmatprep.subr.mxu0 0.0
  %562 = vmatpush2.msra.mxu0 0.0
  %563 = vmatprep.subr.mxu0 0.0
  %564 = vmatpush2.msra.mxu0 0.0
  %565 = vmatprep.mubr.f32.mxu0 0.0
  %566 = vmatmul.mubr.f32.gmra.mxu0 %v474
  %v567 = vpop.f32.mrf.mxu0
  %v568 = vadd.f32 %v465, %v567
  %v569 = vpop.f32.mrf.mxu0
  %v570 = vadd.f32 %v465, %v569
  %571 = vmatprep.mubr.f32.mxu0 0.0
  %572 = vmatmul.mubr.f32.gmra.mxu0 %v477
  %v573 = vpop.f32.mrf.mxu0
  %v574 = vadd.f32 %v470, %v573
  %v575 = vpop.f32.mrf.mxu0
  %v576 = vadd.f32 %v470, %v575
  %577 = vdwg.mxu0
  %578 = vmatprep.subr.mxu0 0.0
  %579 = vmatpush1.msra.mxu0 0.0
  %580 = vmatprep.subr.mxu0 0.0
  %581 = vmatpush1.msra.mxu0 0.0
  %582 = vmatprep.subr.mxu0 0.0
  %583 = vmatpush1.msra.mxu0 0.0
  %584 = vmatprep.subr.mxu0 0.0
  %585 = vmatpush1.msra.mxu0 0.0
  %586 = vmatprep.subr.mxu0 0.0
  %587 = vmatpush1.msra.mxu0 0.0
  %588 = vmatprep.subr.mxu0 0.0
  %589 = vmatpush1.msra.mxu0 0.0
  %590 = vmatprep.subr.mxu0 0.0
  %591 = vmatpush1.msra.mxu0 0.0
  %592 = vmatprep.subr.mxu0 0.0
  %593 = vmatpush1.msra.mxu0 0.0
  %594 = vmatprep.subr.mxu0 0.0
  %595 = vmatpush1.msra.mxu0 0.0
  %596 = vmatprep.subr.mxu0 0.0
  %597 = vmatpush1.msra.mxu0 0.0
  %598 = vmatprep.subr.mxu0 0.0
  %599 = vmatpush1.msra.mxu0 0.0
  %600 = vmatprep.subr.mxu0 0.0
  %601 = vmatpush1.msra.mxu0 0.0
  %602 = vmatprep.subr.mxu0 0.0
  %603 = vmatpush1.msra.mxu0 0.0
  %604 = vmatprep.subr.mxu0 0.0
  %605 = vmatpush1.msra.mxu0 0.0
  %606 = vmatprep.subr.mxu0 %v490
  %607 = vmatpush1.msra.mxu0 %v487
  %608 = vmatprep.subr.mxu0 %v447
  %609 = vmatpush1.msra.mxu0 %v446
  %610 = vmatprep.subr.mxu0 0.0
  %611 = vmatpush2.msra.mxu0 0.0
  %612 = vmatprep.subr.mxu0 0.0
  %613 = vmatpush2.msra.mxu0 0.0
  %614 = vmatprep.subr.mxu0 0.0
  %615 = vmatpush2.msra.mxu0 0.0
  %616 = vmatprep.subr.mxu0 0.0
  %617 = vmatpush2.msra.mxu0 0.0
  %618 = vmatprep.subr.mxu0 0.0
  %619 = vmatpush2.msra.mxu0 0.0
  %620 = vmatprep.subr.mxu0 0.0
  %621 = vmatpush2.msra.mxu0 0.0
  %622 = vmatprep.subr.mxu0 0.0
  %623 = vmatpush2.msra.mxu0 0.0
  %624 = vmatprep.subr.mxu0 0.0
  %625 = vmatpush2.msra.mxu0 0.0
  %626 = vmatprep.subr.mxu0 0.0
  %627 = vmatpush2.msra.mxu0 0.0
  %628 = vmatprep.subr.mxu0 0.0
  %629 = vmatpush2.msra.mxu0 0.0
  %630 = vmatprep.subr.mxu0 0.0
  %631 = vmatpush2.msra.mxu0 0.0
  %632 = vmatprep.subr.mxu0 0.0
  %633 = vmatpush2.msra.mxu0 0.0
  %634 = vmatprep.subr.mxu0 0.0
  %635 = vmatpush2.msra.mxu0 0.0
  %636 = vmatprep.subr.mxu0 0.0
  %637 = vmatpush2.msra.mxu0 0.0
  %638 = vmatprep.subr.mxu0 0.0
  %639 = vmatpush2.msra.mxu0 0.0
  %640 = vmatprep.subr.mxu0 0.0
  %641 = vmatpush2.msra.mxu0 0.0
  %642 = vmatprep.mubr.f32.mxu0 0.0
  %643 = vmatmul.mubr.f32.gmra.mxu0 %v474
  %v644 = vpop.f32.mrf.mxu0
  %v645 = vadd.f32 %v465, %v644
  %v646 = vpop.f32.mrf.mxu0
  %v647 = vadd.f32 %v465, %v646
  %648 = vmatprep.mubr.f32.mxu0 0.0
  %649 = vmatmul.mubr.f32.gmra.mxu0 %v477
  %v650 = vpop.f32.mrf.mxu0
  %v651 = vadd.f32 %v470, %v650
  %v652 = vpop.f32.mrf.mxu0
  %v653 = vadd.f32 %v470, %v652
  %654 = vdwg.mxu0
  %655 = vmatprep.subr.mxu0 0.0
  %656 = vmatpush1.msra.mxu0 0.0
  %657 = vmatprep.subr.mxu0 0.0
  %658 = vmatpush1.msra.mxu0 0.0
  %659 = vmatprep.subr.mxu0 0.0
  %660 = vmatpush1.msra.mxu0 0.0
  %661 = vmatprep.subr.mxu0 0.0
  %662 = vmatpush1.msra.mxu0 0.0
  %663 = vmatprep.subr.mxu0 0.0
  %664 = vmatpush1.msra.mxu0 0.0
  %665 = vmatprep.subr.mxu0 0.0
  %666 = vmatpush1.msra.mxu0 0.0
  %667 = vmatprep.subr.mxu0 0.0
  %668 = vmatpush1.msra.mxu0 0.0
  %669 = vmatprep.subr.mxu0 0.0
  %670 = vmatpush1.msra.mxu0 0.0
  %671 = vmatprep.subr.mxu0 0.0
  %672 = vmatpush1.msra.mxu0 0.0
  %673 = vmatprep.subr.mxu0 0.0
  %674 = vmatpush1.msra.mxu0 0.0
  %675 = vmatprep.subr.mxu0 0.0
  %676 = vmatpush1.msra.mxu0 0.0
  %677 = vmatprep.subr.mxu0 0.0
  %678 = vmatpush1.msra.mxu0 0.0
  %679 = vmatprep.subr.mxu0 0.0
  %680 = vmatpush1.msra.mxu0 0.0
  %681 = vmatprep.subr.mxu0 0.0
  %682 = vmatpush1.msra.mxu0 0.0
  %683 = vmatprep.subr.mxu0 %v496
  %684 = vmatpush1.msra.mxu0 %v493
  %685 = vmatprep.subr.mxu0 %v449
  %686 = vmatpush1.msra.mxu0 %v448
  %687 = vmatprep.subr.mxu0 0.0
  %688 = vmatpush2.msra.mxu0 0.0
  %689 = vmatprep.subr.mxu0 0.0
  %690 = vmatpush2.msra.mxu0 0.0
  %691 = vmatprep.subr.mxu0 0.0
  %692 = vmatpush2.msra.mxu0 0.0
  %693 = vmatprep.subr.mxu0 0.0
  %694 = vmatpush2.msra.mxu0 0.0
  %695 = vmatprep.subr.mxu0 0.0
  %696 = vmatpush2.msra.mxu0 0.0
  %697 = vmatprep.subr.mxu0 0.0
  %698 = vmatpush2.msra.mxu0 0.0
  %699 = vmatprep.subr.mxu0 0.0
  %700 = vmatpush2.msra.mxu0 0.0
  %701 = vmatprep.subr.mxu0 0.0
  %702 = vmatpush2.msra.mxu0 0.0
  %703 = vmatprep.subr.mxu0 0.0
  %704 = vmatpush2.msra.mxu0 0.0
  %705 = vmatprep.subr.mxu0 0.0
  %706 = vmatpush2.msra.mxu0 0.0
  %707 = vmatprep.subr.mxu0 0.0
  %708 = vmatpush2.msra.mxu0 0.0
  %709 = vmatprep.subr.mxu0 0.0
  %710 = vmatpush2.msra.mxu0 0.0
  %711 = vmatprep.subr.mxu0 0.0
  %712 = vmatpush2.msra.mxu0 0.0
  %713 = vmatprep.subr.mxu0 0.0
  %714 = vmatpush2.msra.mxu0 0.0
  %715 = vmatprep.subr.mxu0 0.0
  %716 = vmatpush2.msra.mxu0 0.0
  %717 = vmatprep.subr.mxu0 0.0
  %718 = vmatpush2.msra.mxu0 0.0
  %719 = vmatprep.mubr.f32.mxu0 0.0
  %720 = vmatmul.mubr.f32.gmra.mxu0 %v474
  %v721 = vpop.f32.mrf.mxu0
  %v722 = vadd.f32 %v465, %v721
  %v723 = vpop.f32.mrf.mxu0
  %v724 = vadd.f32 %v465, %v723
  %725 = vmatprep.mubr.f32.mxu0 0.0
  %726 = vmatmul.mubr.f32.gmra.mxu0 %v477
  %v727 = vpop.f32.mrf.mxu0
  %v728 = vadd.f32 %v470, %v727
  %v729 = vpop.f32.mrf.mxu0
  %v730 = vadd.f32 %v470, %v729
  %731 = vdwg.mxu0
  %732 = vmatprep.subr.mxu0 0.0
  %733 = vmatpush1.msra.mxu0 0.0
  %734 = vmatprep.subr.mxu0 0.0
  %735 = vmatpush1.msra.mxu0 0.0
  %736 = vmatprep.subr.mxu0 0.0
  %737 = vmatpush1.msra.mxu0 0.0
  %738 = vmatprep.subr.mxu0 0.0
  %739 = vmatpush1.msra.mxu0 0.0
  %740 = vmatprep.subr.mxu0 0.0
  %741 = vmatpush1.msra.mxu0 0.0
  %742 = vmatprep.subr.mxu0 0.0
  %743 = vmatpush1.msra.mxu0 0.0
  %744 = vmatprep.subr.mxu0 0.0
  %745 = vmatpush1.msra.mxu0 0.0
  %746 = vmatprep.subr.mxu0 0.0
  %747 = vmatpush1.msra.mxu0 0.0
  %748 = vmatprep.subr.mxu0 0.0
  %749 = vmatpush1.msra.mxu0 0.0
  %750 = vmatprep.subr.mxu0 0.0
  %751 = vmatpush1.msra.mxu0 0.0
  %752 = vmatprep.subr.mxu0 0.0
  %753 = vmatpush1.msra.mxu0 0.0
  %754 = vmatprep.subr.mxu0 0.0
  %755 = vmatpush1.msra.mxu0 0.0
  %756 = vmatprep.subr.mxu0 0.0
  %757 = vmatpush1.msra.mxu0 0.0
  %758 = vmatprep.subr.mxu0 0.0
  %759 = vmatpush1.msra.mxu0 0.0
  %760 = vmatprep.subr.mxu0 0.0
  %761 = vmatpush1.msra.mxu0 %v499
  %762 = vmatprep.subr.mxu0 0.0
  %763 = vmatpush1.msra.mxu0 %v450
  %764 = vmatprep.subr.mxu0 0.0
  %765 = vmatpush2.msra.mxu0 0.0
  %766 = vmatprep.subr.mxu0 0.0
  %767 = vmatpush2.msra.mxu0 0.0
  %768 = vmatprep.subr.mxu0 0.0
  %769 = vmatpush2.msra.mxu0 0.0
  %770 = vmatprep.subr.mxu0 0.0
  %771 = vmatpush2.msra.mxu0 0.0
  %772 = vmatprep.subr.mxu0 0.0
  %773 = vmatpush2.msra.mxu0 0.0
  %774 = vmatprep.subr.mxu0 0.0
  %775 = vmatpush2.msra.mxu0 0.0
  %776 = vmatprep.subr.mxu0 0.0
  %777 = vmatpush2.msra.mxu0 0.0
  %778 = vmatprep.subr.mxu0 0.0
  %779 = vmatpush2.msra.mxu0 0.0
  %780 = vmatprep.subr.mxu0 0.0
  %781 = vmatpush2.msra.mxu0 0.0
  %782 = vmatprep.subr.mxu0 0.0
  %783 = vmatpush2.msra.mxu0 0.0
  %784 = vmatprep.subr.mxu0 0.0
  %785 = vmatpush2.msra.mxu0 0.0
  %786 = vmatprep.subr.mxu0 0.0
  %787 = vmatpush2.msra.mxu0 0.0
  %788 = vmatprep.subr.mxu0 0.0
  %789 = vmatpush2.msra.mxu0 0.0
  %790 = vmatprep.subr.mxu0 0.0
  %791 = vmatpush2.msra.mxu0 0.0
  %792 = vmatprep.subr.mxu0 0.0
  %793 = vmatpush2.msra.mxu0 0.0
  %794 = vmatprep.subr.mxu0 0.0
  %795 = vmatpush2.msra.mxu0 0.0
  %796 = vmatprep.mubr.f32.mxu0 0.0
  %797 = vmatmul.mubr.f32.gmra.mxu0 %v474
  %v798 = vpop.f32.mrf.mxu0
  %v799 = vadd.f32 %v465, %v798
  %v800 = vpop.f32.mrf.mxu0
  %801 = vmatprep.mubr.f32.mxu0 0.0
  %802 = vmatmul.mubr.f32.gmra.mxu0 %v477
  %v803 = vpop.f32.mrf.mxu0
  %v804 = vadd.f32 %v470, %v803
  %v805 = vpop.f32.mrf.mxu0
  %806 = vdwg.mxu0
  %v807 = vmul.f32 %v568, 0.70710677
  %v808 = vmul.f32 %v570, 0.70710677
  %v809 = vmul.f32 %v645, 0.70710677
  %v810 = vmul.f32 %v647, 0.70710677
  %v811 = vmul.f32 %v722, 0.70710677
  %v812 = vmul.f32 %v724, 0.70710677
  %v813 = vmul.f32 %v799, 0.70710677
  %v814 = vmul.f32 %v574, 0.70710677
  %v815 = vmul.f32 %v576, 0.70710677
  %v816 = vmul.f32 %v651, 0.70710677
  %v817 = vmul.f32 %v653, 0.70710677
  %v818 = vmul.f32 %v728, 0.70710677
  %v819 = vmul.f32 %v730, 0.70710677
  %v820 = vmul.f32 %v804, 0.70710677
  %v821 = verf.f32.pop %v807
  %v822 = verf.f32.pop %v808
  %v823 = verf.f32.pop %v809
  %v824 = verf.f32.pop %v810
  %v825 = verf.f32.pop %v811
  %v826 = verf.f32.pop %v812
  %v827 = verf.f32.pop %v813
  %v828 = verf.f32.pop %v814
  %v829 = verf.f32.pop %v815
  %v830 = verf.f32.pop %v816
  %v831 = verf.f32.pop %v817
  %v832 = verf.f32.pop %v818
  %v833 = verf.f32.pop %v819
  %v834 = verf.f32.pop %v820
  %v835 = vadd.f32 %v821, 1.0
  %v836 = vadd.f32 %v822, 1.0
  %v837 = vadd.f32 %v823, 1.0
  %v838 = vadd.f32 %v824, 1.0
  %v839 = vadd.f32 %v825, 1.0
  %v840 = vadd.f32 %v826, 1.0
  %v841 = vadd.f32 %v827, 1.0
  %v842 = vadd.f32 %v828, 1.0
  %v843 = vadd.f32 %v829, 1.0
  %v844 = vadd.f32 %v830, 1.0
  %v845 = vadd.f32 %v831, 1.0
  %v846 = vadd.f32 %v832, 1.0
  %v847 = vadd.f32 %v833, 1.0
  %v848 = vadd.f32 %v834, 1.0
  %v849 = vmul.f32 %v568, %v835
  %v850 = vmul.f32 %v570, %v836
  %v851 = vmul.f32 %v645, %v837
  %v852 = vmul.f32 %v647, %v838
  %v853 = vmul.f32 %v722, %v839
  %v854 = vmul.f32 %v724, %v840
  %v855 = vmul.f32 %v799, %v841
  %v856 = vmul.f32 %v574, %v842
  %v857 = vmul.f32 %v576, %v843
  %v858 = vmul.f32 %v651, %v844
  %v859 = vmul.f32 %v653, %v845
  %v860 = vmul.f32 %v728, %v846
  %v861 = vmul.f32 %v730, %v847
  %v862 = vmul.f32 %v804, %v848
  %v863 = vld [vmem:[%s5] sm:$0xff]
  %v864 = vld [vmem:[%s5 + $0x8] sm:$0xff]
  %v865 = vld [vmem:[%s5 + $0x10] sm:$0xf]
  %v866 = vld [vmem:[%s6] sm:$0xff]
  %v867 = vld [vmem:[%s6 + $0x8] sm:$0xff]
  %v868 = vld [vmem:[%s6 + $0x10] sm:$0xf]
  %870 = vset.pattern.permute.xlu0 0
  %871 = vperm.xlu0 %870, %v866
  %v872 = vpop.permute.xlu0 %871
  %875 = vset.pattern.permute.xlu0 0
  %876 = vperm.xlu0 %875, %v867
  %v877 = vpop.permute.xlu0 %876
  %880 = vset.pattern.permute.xlu0 0
  %881 = vperm.xlu0 %880, %v868
  %v882 = vpop.permute.xlu0 %881
  %v885 = vsel %vm472, %v863, 0
  %v888 = vsel %vm472, %v864, 0
  %v891 = vsel %vm472, %v865, 0
  %v894 = vsel %vm479, %v856, 0
  %v897 = vsel %vm479, %v857, 0
  %v900 = vsel %vm479, %v858, 0
  %v903 = vsel %vm479, %v859, 0
  %v906 = vsel %vm479, %v860, 0
  %v909 = vsel %vm479, %v861, 0
  %v912 = vsel %vm479, %v862, 0
  %914 = vmatprep.subr.mxu0 0.0
  %915 = vmatpush1.msra.mxu0 0.0
  %916 = vmatprep.subr.mxu0 0.0
  %917 = vmatpush1.msra.mxu0 0.0
  %918 = vmatprep.subr.mxu0 0.0
  %919 = vmatpush1.msra.mxu0 0.0
  %920 = vmatprep.subr.mxu0 0.0
  %921 = vmatpush1.msra.mxu0 0.0
  %922 = vmatprep.subr.mxu0 0.0
  %923 = vmatpush1.msra.mxu0 0.0
  %924 = vmatprep.subr.mxu0 0.0
  %925 = vmatpush1.msra.mxu0 0.0
  %926 = vmatprep.subr.mxu0 0.0
  %927 = vmatpush1.msra.mxu0 0.0
  %928 = vmatprep.subr.mxu0 0.0
  %929 = vmatpush1.msra.mxu0 0.0
  %930 = vmatprep.subr.mxu0 0.0
  %931 = vmatpush1.msra.mxu0 0.0
  %932 = vmatprep.subr.mxu0 0.0
  %933 = vmatpush1.msra.mxu0 0.0
  %934 = vmatprep.subr.mxu0 0.0
  %935 = vmatpush1.msra.mxu0 0.0
  %936 = vmatprep.subr.mxu0 0.0
  %937 = vmatpush1.msra.mxu0 0.0
  %938 = vmatprep.subr.mxu0 0.0
  %939 = vmatpush1.msra.mxu0 0.0
  %940 = vmatprep.subr.mxu0 0.0
  %941 = vmatpush1.msra.mxu0 0.0
  %942 = vmatprep.subr.mxu0 %v897
  %943 = vmatpush1.msra.mxu0 %v894
  %944 = vmatprep.subr.mxu0 %v850
  %945 = vmatpush1.msra.mxu0 %v849
  %946 = vmatprep.subr.mxu0 0.0
  %947 = vmatpush2.msra.mxu0 0.0
  %948 = vmatprep.subr.mxu0 0.0
  %949 = vmatpush2.msra.mxu0 0.0
  %950 = vmatprep.subr.mxu0 0.0
  %951 = vmatpush2.msra.mxu0 0.0
  %952 = vmatprep.subr.mxu0 0.0
  %953 = vmatpush2.msra.mxu0 0.0
  %954 = vmatprep.subr.mxu0 0.0
  %955 = vmatpush2.msra.mxu0 0.0
  %956 = vmatprep.subr.mxu0 0.0
  %957 = vmatpush2.msra.mxu0 0.0
  %958 = vmatprep.subr.mxu0 0.0
  %959 = vmatpush2.msra.mxu0 0.0
  %960 = vmatprep.subr.mxu0 0.0
  %961 = vmatpush2.msra.mxu0 0.0
  %962 = vmatprep.subr.mxu0 0.0
  %963 = vmatpush2.msra.mxu0 0.0
  %964 = vmatprep.subr.mxu0 0.0
  %965 = vmatpush2.msra.mxu0 0.0
  %966 = vmatprep.subr.mxu0 0.0
  %967 = vmatpush2.msra.mxu0 0.0
  %968 = vmatprep.subr.mxu0 0.0
  %969 = vmatpush2.msra.mxu0 0.0
  %970 = vmatprep.subr.mxu0 0.0
  %971 = vmatpush2.msra.mxu0 0.0
  %972 = vmatprep.subr.mxu0 0.0
  %973 = vmatpush2.msra.mxu0 0.0
  %974 = vmatprep.subr.mxu0 0.0
  %975 = vmatpush2.msra.mxu0 0.0
  %976 = vmatprep.subr.mxu0 0.0
  %977 = vmatpush2.msra.mxu0 0.0
  %978 = vmatprep.mubr.f32.mxu0 0.0
  %979 = vmatmul.mubr.f32.gmra.mxu0 %v885
  %v980 = vpop.f32.mrf.mxu0
  %v981 = vadd.f32 %v872, %v980
  %v982 = vpop.f32.mrf.mxu0
  %v983 = vadd.f32 %v872, %v982
  %984 = vmatprep.mubr.f32.mxu0 0.0
  %985 = vmatmul.mubr.f32.gmra.mxu0 %v888
  %v986 = vpop.f32.mrf.mxu0
  %v987 = vadd.f32 %v877, %v986
  %v988 = vpop.f32.mrf.mxu0
  %v989 = vadd.f32 %v877, %v988
  %990 = vmatprep.mubr.f32.mxu0 0.0
  %991 = vmatmul.mubr.f32.gmra.mxu0 %v891
  %v992 = vpop.f32.mrf.mxu0
  %v993 = vadd.f32 %v882, %v992
  %v994 = vpop.f32.mrf.mxu0
  %v995 = vadd.f32 %v882, %v994
  %996 = vdwg.mxu0
  %997 = vmatprep.subr.mxu0 0.0
  %998 = vmatpush1.msra.mxu0 0.0
  %999 = vmatprep.subr.mxu0 0.0
  %1000 = vmatpush1.msra.mxu0 0.0
  %1001 = vmatprep.subr.mxu0 0.0
  %1002 = vmatpush1.msra.mxu0 0.0
  %1003 = vmatprep.subr.mxu0 0.0
  %1004 = vmatpush1.msra.mxu0 0.0
  %1005 = vmatprep.subr.mxu0 0.0
  %1006 = vmatpush1.msra.mxu0 0.0
  %1007 = vmatprep.subr.mxu0 0.0
  %1008 = vmatpush1.msra.mxu0 0.0
  %1009 = vmatprep.subr.mxu0 0.0
  %1010 = vmatpush1.msra.mxu0 0.0
  %1011 = vmatprep.subr.mxu0 0.0
  %1012 = vmatpush1.msra.mxu0 0.0
  %1013 = vmatprep.subr.mxu0 0.0
  %1014 = vmatpush1.msra.mxu0 0.0
  %1015 = vmatprep.subr.mxu0 0.0
  %1016 = vmatpush1.msra.mxu0 0.0
  %1017 = vmatprep.subr.mxu0 0.0
  %1018 = vmatpush1.msra.mxu0 0.0
  %1019 = vmatprep.subr.mxu0 0.0
  %1020 = vmatpush1.msra.mxu0 0.0
  %1021 = vmatprep.subr.mxu0 0.0
  %1022 = vmatpush1.msra.mxu0 0.0
  %1023 = vmatprep.subr.mxu0 0.0
  %1024 = vmatpush1.msra.mxu0 0.0
  %1025 = vmatprep.subr.mxu0 %v903
  %1026 = vmatpush1.msra.mxu0 %v900
  %1027 = vmatprep.subr.mxu0 %v852
  %1028 = vmatpush1.msra.mxu0 %v851
  %1029 = vmatprep.subr.mxu0 0.0
  %1030 = vmatpush2.msra.mxu0 0.0
  %1031 = vmatprep.subr.mxu0 0.0
  %1032 = vmatpush2.msra.mxu0 0.0
  %1033 = vmatprep.subr.mxu0 0.0
  %1034 = vmatpush2.msra.mxu0 0.0
  %1035 = vmatprep.subr.mxu0 0.0
  %1036 = vmatpush2.msra.mxu0 0.0
  %1037 = vmatprep.subr.mxu0 0.0
  %1038 = vmatpush2.msra.mxu0 0.0
  %1039 = vmatprep.subr.mxu0 0.0
  %1040 = vmatpush2.msra.mxu0 0.0
  %1041 = vmatprep.subr.mxu0 0.0
  %1042 = vmatpush2.msra.mxu0 0.0
  %1043 = vmatprep.subr.mxu0 0.0
  %1044 = vmatpush2.msra.mxu0 0.0
  %1045 = vmatprep.subr.mxu0 0.0
  %1046 = vmatpush2.msra.mxu0 0.0
  %1047 = vmatprep.subr.mxu0 0.0
  %1048 = vmatpush2.msra.mxu0 0.0
  %1049 = vmatprep.subr.mxu0 0.0
  %1050 = vmatpush2.msra.mxu0 0.0
  %1051 = vmatprep.subr.mxu0 0.0
  %1052 = vmatpush2.msra.mxu0 0.0
  %1053 = vmatprep.subr.mxu0 0.0
  %1054 = vmatpush2.msra.mxu0 0.0
  %1055 = vmatprep.subr.mxu0 0.0
  %1056 = vmatpush2.msra.mxu0 0.0
  %1057 = vmatprep.subr.mxu0 0.0
  %1058 = vmatpush2.msra.mxu0 0.0
  %1059 = vmatprep.subr.mxu0 0.0
  %1060 = vmatpush2.msra.mxu0 0.0
  %1061 = vmatprep.mubr.f32.mxu0 0.0
  %1062 = vmatmul.mubr.f32.gmra.mxu0 %v885
  %v1063 = vpop.f32.mrf.mxu0
  %v1064 = vadd.f32 %v872, %v1063
  %v1065 = vpop.f32.mrf.mxu0
  %v1066 = vadd.f32 %v872, %v1065
  %1067 = vmatprep.mubr.f32.mxu0 0.0
  %1068 = vmatmul.mubr.f32.gmra.mxu0 %v888
  %v1069 = vpop.f32.mrf.mxu0
  %v1070 = vadd.f32 %v877, %v1069
  %v1071 = vpop.f32.mrf.mxu0
  %v1072 = vadd.f32 %v877, %v1071
  %1073 = vmatprep.mubr.f32.mxu0 0.0
  %1074 = vmatmul.mubr.f32.gmra.mxu0 %v891
  %v1075 = vpop.f32.mrf.mxu0
  %v1076 = vadd.f32 %v882, %v1075
  %v1077 = vpop.f32.mrf.mxu0
  %v1078 = vadd.f32 %v882, %v1077
  %1079 = vdwg.mxu0
  %1080 = vmatprep.subr.mxu0 0.0
  %1081 = vmatpush1.msra.mxu0 0.0
  %1082 = vmatprep.subr.mxu0 0.0
  %1083 = vmatpush1.msra.mxu0 0.0
  %1084 = vmatprep.subr.mxu0 0.0
  %1085 = vmatpush1.msra.mxu0 0.0
  %1086 = vmatprep.subr.mxu0 0.0
  %1087 = vmatpush1.msra.mxu0 0.0
  %1088 = vmatprep.subr.mxu0 0.0
  %1089 = vmatpush1.msra.mxu0 0.0
  %1090 = vmatprep.subr.mxu0 0.0
  %1091 = vmatpush1.msra.mxu0 0.0
  %1092 = vmatprep.subr.mxu0 0.0
  %1093 = vmatpush1.msra.mxu0 0.0
  %1094 = vmatprep.subr.mxu0 0.0
  %1095 = vmatpush1.msra.mxu0 0.0
  %1096 = vmatprep.subr.mxu0 0.0
  %1097 = vmatpush1.msra.mxu0 0.0
  %1098 = vmatprep.subr.mxu0 0.0
  %1099 = vmatpush1.msra.mxu0 0.0
  %1100 = vmatprep.subr.mxu0 0.0
  %1101 = vmatpush1.msra.mxu0 0.0
  %1102 = vmatprep.subr.mxu0 0.0
  %1103 = vmatpush1.msra.mxu0 0.0
  %1104 = vmatprep.subr.mxu0 0.0
  %1105 = vmatpush1.msra.mxu0 0.0
  %1106 = vmatprep.subr.mxu0 0.0
  %1107 = vmatpush1.msra.mxu0 0.0
  %1108 = vmatprep.subr.mxu0 %v909
  %1109 = vmatpush1.msra.mxu0 %v906
  %1110 = vmatprep.subr.mxu0 %v854
  %1111 = vmatpush1.msra.mxu0 %v853
  %1112 = vmatprep.subr.mxu0 0.0
  %1113 = vmatpush2.msra.mxu0 0.0
  %1114 = vmatprep.subr.mxu0 0.0
  %1115 = vmatpush2.msra.mxu0 0.0
  %1116 = vmatprep.subr.mxu0 0.0
  %1117 = vmatpush2.msra.mxu0 0.0
  %1118 = vmatprep.subr.mxu0 0.0
  %1119 = vmatpush2.msra.mxu0 0.0
  %1120 = vmatprep.subr.mxu0 0.0
  %1121 = vmatpush2.msra.mxu0 0.0
  %1122 = vmatprep.subr.mxu0 0.0
  %1123 = vmatpush2.msra.mxu0 0.0
  %1124 = vmatprep.subr.mxu0 0.0
  %1125 = vmatpush2.msra.mxu0 0.0
  %1126 = vmatprep.subr.mxu0 0.0
  %1127 = vmatpush2.msra.mxu0 0.0
  %1128 = vmatprep.subr.mxu0 0.0
  %1129 = vmatpush2.msra.mxu0 0.0
  %1130 = vmatprep.subr.mxu0 0.0
  %1131 = vmatpush2.msra.mxu0 0.0
  %1132 = vmatprep.subr.mxu0 0.0
  %1133 = vmatpush2.msra.mxu0 0.0
  %1134 = vmatprep.subr.mxu0 0.0
  %1135 = vmatpush2.msra.mxu0 0.0
  %1136 = vmatprep.subr.mxu0 0.0
  %1137 = vmatpush2.msra.mxu0 0.0
  %1138 = vmatprep.subr.mxu0 0.0
  %1139 = vmatpush2.msra.mxu0 0.0
  %1140 = vmatprep.subr.mxu0 0.0
  %1141 = vmatpush2.msra.mxu0 0.0
  %1142 = vmatprep.subr.mxu0 0.0
  %1143 = vmatpush2.msra.mxu0 0.0
  %1144 = vmatprep.mubr.f32.mxu0 0.0
  %1145 = vmatmul.mubr.f32.gmra.mxu0 %v885
  %v1146 = vpop.f32.mrf.mxu0
  %v1147 = vadd.f32 %v872, %v1146
  %v1148 = vpop.f32.mrf.mxu0
  %v1149 = vadd.f32 %v872, %v1148
  %1150 = vmatprep.mubr.f32.mxu0 0.0
  %1151 = vmatmul.mubr.f32.gmra.mxu0 %v888
  %v1152 = vpop.f32.mrf.mxu0
  %v1153 = vadd.f32 %v877, %v1152
  %v1154 = vpop.f32.mrf.mxu0
  %v1155 = vadd.f32 %v877, %v1154
  %1156 = vmatprep.mubr.f32.mxu0 0.0
  %1157 = vmatmul.mubr.f32.gmra.mxu0 %v891
  %v1158 = vpop.f32.mrf.mxu0
  %v1159 = vadd.f32 %v882, %v1158
  %v1160 = vpop.f32.mrf.mxu0
  %v1161 = vadd.f32 %v882, %v1160
  %1162 = vdwg.mxu0
  %1163 = vmatprep.subr.mxu0 0.0
  %1164 = vmatpush1.msra.mxu0 0.0
  %1165 = vmatprep.subr.mxu0 0.0
  %1166 = vmatpush1.msra.mxu0 0.0
  %1167 = vmatprep.subr.mxu0 0.0
  %1168 = vmatpush1.msra.mxu0 0.0
  %1169 = vmatprep.subr.mxu0 0.0
  %1170 = vmatpush1.msra.mxu0 0.0
  %1171 = vmatprep.subr.mxu0 0.0
  %1172 = vmatpush1.msra.mxu0 0.0
  %1173 = vmatprep.subr.mxu0 0.0
  %1174 = vmatpush1.msra.mxu0 0.0
  %1175 = vmatprep.subr.mxu0 0.0
  %1176 = vmatpush1.msra.mxu0 0.0
  %1177 = vmatprep.subr.mxu0 0.0
  %1178 = vmatpush1.msra.mxu0 0.0
  %1179 = vmatprep.subr.mxu0 0.0
  %1180 = vmatpush1.msra.mxu0 0.0
  %1181 = vmatprep.subr.mxu0 0.0
  %1182 = vmatpush1.msra.mxu0 0.0
  %1183 = vmatprep.subr.mxu0 0.0
  %1184 = vmatpush1.msra.mxu0 0.0
  %1185 = vmatprep.subr.mxu0 0.0
  %1186 = vmatpush1.msra.mxu0 0.0
  %1187 = vmatprep.subr.mxu0 0.0
  %1188 = vmatpush1.msra.mxu0 0.0
  %1189 = vmatprep.subr.mxu0 0.0
  %1190 = vmatpush1.msra.mxu0 0.0
  %1191 = vmatprep.subr.mxu0 0.0
  %1192 = vmatpush1.msra.mxu0 %v912
  %1193 = vmatprep.subr.mxu0 0.0
  %1194 = vmatpush1.msra.mxu0 %v855
  %1195 = vmatprep.subr.mxu0 0.0
  %1196 = vmatpush2.msra.mxu0 0.0
  %1197 = vmatprep.subr.mxu0 0.0
  %1198 = vmatpush2.msra.mxu0 0.0
  %1199 = vmatprep.subr.mxu0 0.0
  %1200 = vmatpush2.msra.mxu0 0.0
  %1201 = vmatprep.subr.mxu0 0.0
  %1202 = vmatpush2.msra.mxu0 0.0
  %1203 = vmatprep.subr.mxu0 0.0
  %1204 = vmatpush2.msra.mxu0 0.0
  %1205 = vmatprep.subr.mxu0 0.0
  %1206 = vmatpush2.msra.mxu0 0.0
  %1207 = vmatprep.subr.mxu0 0.0
  %1208 = vmatpush2.msra.mxu0 0.0
  %1209 = vmatprep.subr.mxu0 0.0
  %1210 = vmatpush2.msra.mxu0 0.0
  %1211 = vmatprep.subr.mxu0 0.0
  %1212 = vmatpush2.msra.mxu0 0.0
  %1213 = vmatprep.subr.mxu0 0.0
  %1214 = vmatpush2.msra.mxu0 0.0
  %1215 = vmatprep.subr.mxu0 0.0
  %1216 = vmatpush2.msra.mxu0 0.0
  %1217 = vmatprep.subr.mxu0 0.0
  %1218 = vmatpush2.msra.mxu0 0.0
  %1219 = vmatprep.subr.mxu0 0.0
  %1220 = vmatpush2.msra.mxu0 0.0
  %1221 = vmatprep.subr.mxu0 0.0
  %1222 = vmatpush2.msra.mxu0 0.0
  %1223 = vmatprep.subr.mxu0 0.0
  %1224 = vmatpush2.msra.mxu0 0.0
  %1225 = vmatprep.subr.mxu0 0.0
  %1226 = vmatpush2.msra.mxu0 0.0
  %1227 = vmatprep.mubr.f32.mxu0 0.0
  %1228 = vmatmul.mubr.f32.gmra.mxu0 %v885
  %v1229 = vpop.f32.mrf.mxu0
  %v1230 = vadd.f32 %v872, %v1229
  %v1231 = vpop.f32.mrf.mxu0
  %1232 = vmatprep.mubr.f32.mxu0 0.0
  %1233 = vmatmul.mubr.f32.gmra.mxu0 %v888
  %v1234 = vpop.f32.mrf.mxu0
  %v1235 = vadd.f32 %v877, %v1234
  %v1236 = vpop.f32.mrf.mxu0
  %1237 = vmatprep.mubr.f32.mxu0 0.0
  %1238 = vmatmul.mubr.f32.gmra.mxu0 %v891
  %v1239 = vpop.f32.mrf.mxu0
  %v1240 = vadd.f32 %v882, %v1239
  %v1241 = vpop.f32.mrf.mxu0
  %1242 = vdwg.mxu0
  %v1243 = vmul.f32 %v981, 0.70710677
  %v1244 = vmul.f32 %v983, 0.70710677
  %v1245 = vmul.f32 %v1064, 0.70710677
  %v1246 = vmul.f32 %v1066, 0.70710677
  %v1247 = vmul.f32 %v1147, 0.70710677
  %v1248 = vmul.f32 %v1149, 0.70710677
  %v1249 = vmul.f32 %v1230, 0.70710677
  %v1250 = vmul.f32 %v987, 0.70710677
  %v1251 = vmul.f32 %v989, 0.70710677
  %v1252 = vmul.f32 %v1070, 0.70710677
  %v1253 = vmul.f32 %v1072, 0.70710677
  %v1254 = vmul.f32 %v1153, 0.70710677
  %v1255 = vmul.f32 %v1155, 0.70710677
  %v1256 = vmul.f32 %v1235, 0.70710677
  %v1257 = vmul.f32 %v993, 0.70710677
  %v1258 = vmul.f32 %v995, 0.70710677
  %v1259 = vmul.f32 %v1076, 0.70710677
  %v1260 = vmul.f32 %v1078, 0.70710677
  %v1261 = vmul.f32 %v1159, 0.70710677
  %v1262 = vmul.f32 %v1161, 0.70710677
  %v1263 = vmul.f32 %v1240, 0.70710677
  %v1264 = verf.f32.pop %v1243
  %v1265 = verf.f32.pop %v1244
  %v1266 = verf.f32.pop %v1245
  %v1267 = verf.f32.pop %v1246
  %v1268 = verf.f32.pop %v1247
  %v1269 = verf.f32.pop %v1248
  %v1270 = verf.f32.pop %v1249
  %v1271 = verf.f32.pop %v1250
  %v1272 = verf.f32.pop %v1251
  %v1273 = verf.f32.pop %v1252
  %v1274 = verf.f32.pop %v1253
  %v1275 = verf.f32.pop %v1254
  %v1276 = verf.f32.pop %v1255
  %v1277 = verf.f32.pop %v1256
  %v1278 = verf.f32.pop %v1257
  %v1279 = verf.f32.pop %v1258
  %v1280 = verf.f32.pop %v1259
  %v1281 = verf.f32.pop %v1260
  %v1282 = verf.f32.pop %v1261
  %v1283 = verf.f32.pop %v1262
  %v1284 = verf.f32.pop %v1263
  %v1285 = vadd.f32 %v1264, 1.0
  %v1286 = vadd.f32 %v1265, 1.0
  %v1287 = vadd.f32 %v1266, 1.0
  %v1288 = vadd.f32 %v1267, 1.0
  %v1289 = vadd.f32 %v1268, 1.0
  %v1290 = vadd.f32 %v1269, 1.0
  %v1291 = vadd.f32 %v1270, 1.0
  %v1292 = vadd.f32 %v1271, 1.0
  %v1293 = vadd.f32 %v1272, 1.0
  %v1294 = vadd.f32 %v1273, 1.0
  %v1295 = vadd.f32 %v1274, 1.0
  %v1296 = vadd.f32 %v1275, 1.0
  %v1297 = vadd.f32 %v1276, 1.0
  %v1298 = vadd.f32 %v1277, 1.0
  %v1299 = vadd.f32 %v1278, 1.0
  %v1300 = vadd.f32 %v1279, 1.0
  %v1301 = vadd.f32 %v1280, 1.0
  %v1302 = vadd.f32 %v1281, 1.0
  %v1303 = vadd.f32 %v1282, 1.0
  %v1304 = vadd.f32 %v1283, 1.0
  %v1305 = vadd.f32 %v1284, 1.0
  %v1306 = vmul.f32 %v981, %v1285
  %v1307 = vmul.f32 %v983, %v1286
  %v1308 = vmul.f32 %v1064, %v1287
  %v1309 = vmul.f32 %v1066, %v1288
  %v1310 = vmul.f32 %v1147, %v1289
  %v1311 = vmul.f32 %v1149, %v1290
  %v1312 = vmul.f32 %v1230, %v1291
  %v1313 = vmul.f32 %v987, %v1292
  %v1314 = vmul.f32 %v989, %v1293
  %v1315 = vmul.f32 %v1070, %v1294
  %v1316 = vmul.f32 %v1072, %v1295
  %v1317 = vmul.f32 %v1153, %v1296
  %v1318 = vmul.f32 %v1155, %v1297
  %v1319 = vmul.f32 %v1235, %v1298
  %v1320 = vmul.f32 %v993, %v1299
  %v1321 = vmul.f32 %v995, %v1300
  %v1322 = vmul.f32 %v1076, %v1301
  %v1323 = vmul.f32 %v1078, %v1302
  %v1324 = vmul.f32 %v1159, %v1303
  %v1325 = vmul.f32 %v1161, %v1304
  %v1326 = vmul.f32 %v1240, %v1305
  %v1327 = vld [vmem:[%s7] sm:$0xff]
  %v1328 = vld [vmem:[%s7 + $0x8] sm:$0xff]
  %v1329 = vld [vmem:[%s7 + $0x10] sm:$0x1f]
  %v1330 = vld [vmem:[%s8] sm:$0xff]
  %v1331 = vld [vmem:[%s8 + $0x8] sm:$0xff]
  %v1332 = vld [vmem:[%s8 + $0x10] sm:$0x1f]
  %1334 = vset.pattern.permute.xlu0 0
  %1335 = vperm.xlu0 %1334, %v1330
  %v1336 = vpop.permute.xlu0 %1335
  %1339 = vset.pattern.permute.xlu0 0
  %1340 = vperm.xlu0 %1339, %v1331
  %v1341 = vpop.permute.xlu0 %1340
  %1344 = vset.pattern.permute.xlu0 0
  %1345 = vperm.xlu0 %1344, %v1332
  %v1346 = vpop.permute.xlu0 %1345
  %v1349 = vsel %vm67, %v1327, 0
  %v1352 = vsel %vm67, %v1328, 0
  %v1355 = vsel %vm67, %v1329, 0
  %v1358 = vsel %vm74, %v1320, 0
  %v1361 = vsel %vm74, %v1321, 0
  %v1364 = vsel %vm74, %v1322, 0
  %v1367 = vsel %vm74, %v1323, 0
  %v1370 = vsel %vm74, %v1324, 0
  %v1373 = vsel %vm74, %v1325, 0
  %v1376 = vsel %vm74, %v1326, 0
  %1378 = vmatprep.subr.mxu0 0.0
  %1379 = vmatpush1.msra.mxu0 0.0
  %1380 = vmatprep.subr.mxu0 0.0
  %1381 = vmatpush1.msra.mxu0 0.0
  %1382 = vmatprep.subr.mxu0 0.0
  %1383 = vmatpush1.msra.mxu0 0.0
  %1384 = vmatprep.subr.mxu0 0.0
  %1385 = vmatpush1.msra.mxu0 0.0
  %1386 = vmatprep.subr.mxu0 0.0
  %1387 = vmatpush1.msra.mxu0 0.0
  %1388 = vmatprep.subr.mxu0 0.0
  %1389 = vmatpush1.msra.mxu0 0.0
  %1390 = vmatprep.subr.mxu0 0.0
  %1391 = vmatpush1.msra.mxu0 0.0
  %1392 = vmatprep.subr.mxu0 0.0
  %1393 = vmatpush1.msra.mxu0 0.0
  %1394 = vmatprep.subr.mxu0 0.0
  %1395 = vmatpush1.msra.mxu0 0.0
  %1396 = vmatprep.subr.mxu0 0.0
  %1397 = vmatpush1.msra.mxu0 0.0
  %1398 = vmatprep.subr.mxu0 0.0
  %1399 = vmatpush1.msra.mxu0 0.0
  %1400 = vmatprep.subr.mxu0 0.0
  %1401 = vmatpush1.msra.mxu0 0.0
  %1402 = vmatprep.subr.mxu0 0.0
  %1403 = vmatpush1.msra.mxu0 0.0
  %1404 = vmatprep.subr.mxu0 %v1361
  %1405 = vmatpush1.msra.mxu0 %v1358
  %1406 = vmatprep.subr.mxu0 %v1314
  %1407 = vmatpush1.msra.mxu0 %v1313
  %1408 = vmatprep.subr.mxu0 %v1307
  %1409 = vmatpush1.msra.mxu0 %v1306
  %1410 = vmatprep.subr.mxu0 0.0
  %1411 = vmatpush2.msra.mxu0 0.0
  %1412 = vmatprep.subr.mxu0 0.0
  %1413 = vmatpush2.msra.mxu0 0.0
  %1414 = vmatprep.subr.mxu0 0.0
  %1415 = vmatpush2.msra.mxu0 0.0
  %1416 = vmatprep.subr.mxu0 0.0
  %1417 = vmatpush2.msra.mxu0 0.0
  %1418 = vmatprep.subr.mxu0 0.0
  %1419 = vmatpush2.msra.mxu0 0.0
  %1420 = vmatprep.subr.mxu0 0.0
  %1421 = vmatpush2.msra.mxu0 0.0
  %1422 = vmatprep.subr.mxu0 0.0
  %1423 = vmatpush2.msra.mxu0 0.0
  %1424 = vmatprep.subr.mxu0 0.0
  %1425 = vmatpush2.msra.mxu0 0.0
  %1426 = vmatprep.subr.mxu0 0.0
  %1427 = vmatpush2.msra.mxu0 0.0
  %1428 = vmatprep.subr.mxu0 0.0
  %1429 = vmatpush2.msra.mxu0 0.0
  %1430 = vmatprep.subr.mxu0 0.0
  %1431 = vmatpush2.msra.mxu0 0.0
  %1432 = vmatprep.subr.mxu0 0.0
  %1433 = vmatpush2.msra.mxu0 0.0
  %1434 = vmatprep.subr.mxu0 0.0
  %1435 = vmatpush2.msra.mxu0 0.0
  %1436 = vmatprep.subr.mxu0 0.0
  %1437 = vmatpush2.msra.mxu0 0.0
  %1438 = vmatprep.subr.mxu0 0.0
  %1439 = vmatpush2.msra.mxu0 0.0
  %1440 = vmatprep.subr.mxu0 0.0
  %1441 = vmatpush2.msra.mxu0 0.0
  %1442 = vmatprep.mubr.f32.mxu0 0.0
  %1443 = vmatmul.mubr.f32.gmra.mxu0 %v1349
  %v1444 = vpop.f32.mrf.mxu0
  %v1445 = vadd.f32 %v1336, %v1444
  %v1446 = vpop.f32.mrf.mxu0
  %v1447 = vadd.f32 %v1336, %v1446
  %1448 = vmatprep.mubr.f32.mxu0 0.0
  %1449 = vmatmul.mubr.f32.gmra.mxu0 %v1352
  %v1450 = vpop.f32.mrf.mxu0
  %v1451 = vadd.f32 %v1341, %v1450
  %v1452 = vpop.f32.mrf.mxu0
  %v1453 = vadd.f32 %v1341, %v1452
  %1454 = vmatprep.mubr.f32.mxu0 0.0
  %1455 = vmatmul.mubr.f32.gmra.mxu0 %v1355
  %v1456 = vpop.f32.mrf.mxu0
  %v1457 = vadd.f32 %v1346, %v1456
  %v1458 = vpop.f32.mrf.mxu0
  %v1459 = vadd.f32 %v1346, %v1458
  %1460 = vdwg.mxu0
  %1461 = vmatprep.subr.mxu0 0.0
  %1462 = vmatpush1.msra.mxu0 0.0
  %1463 = vmatprep.subr.mxu0 0.0
  %1464 = vmatpush1.msra.mxu0 0.0
  %1465 = vmatprep.subr.mxu0 0.0
  %1466 = vmatpush1.msra.mxu0 0.0
  %1467 = vmatprep.subr.mxu0 0.0
  %1468 = vmatpush1.msra.mxu0 0.0
  %1469 = vmatprep.subr.mxu0 0.0
  %1470 = vmatpush1.msra.mxu0 0.0
  %1471 = vmatprep.subr.mxu0 0.0
  %1472 = vmatpush1.msra.mxu0 0.0
  %1473 = vmatprep.subr.mxu0 0.0
  %1474 = vmatpush1.msra.mxu0 0.0
  %1475 = vmatprep.subr.mxu0 0.0
  %1476 = vmatpush1.msra.mxu0 0.0
  %1477 = vmatprep.subr.mxu0 0.0
  %1478 = vmatpush1.msra.mxu0 0.0
  %1479 = vmatprep.subr.mxu0 0.0
  %1480 = vmatpush1.msra.mxu0 0.0
  %1481 = vmatprep.subr.mxu0 0.0
  %1482 = vmatpush1.msra.mxu0 0.0
  %1483 = vmatprep.subr.mxu0 0.0
  %1484 = vmatpush1.msra.mxu0 0.0
  %1485 = vmatprep.subr.mxu0 0.0
  %1486 = vmatpush1.msra.mxu0 0.0
  %1487 = vmatprep.subr.mxu0 %v1367
  %1488 = vmatpush1.msra.mxu0 %v1364
  %1489 = vmatprep.subr.mxu0 %v1316
  %1490 = vmatpush1.msra.mxu0 %v1315
  %1491 = vmatprep.subr.mxu0 %v1309
  %1492 = vmatpush1.msra.mxu0 %v1308
  %1493 = vmatprep.subr.mxu0 0.0
  %1494 = vmatpush2.msra.mxu0 0.0
  %1495 = vmatprep.subr.mxu0 0.0
  %1496 = vmatpush2.msra.mxu0 0.0
  %1497 = vmatprep.subr.mxu0 0.0
  %1498 = vmatpush2.msra.mxu0 0.0
  %1499 = vmatprep.subr.mxu0 0.0
  %1500 = vmatpush2.msra.mxu0 0.0
  %1501 = vmatprep.subr.mxu0 0.0
  %1502 = vmatpush2.msra.mxu0 0.0
  %1503 = vmatprep.subr.mxu0 0.0
  %1504 = vmatpush2.msra.mxu0 0.0
  %1505 = vmatprep.subr.mxu0 0.0
  %1506 = vmatpush2.msra.mxu0 0.0
  %1507 = vmatprep.subr.mxu0 0.0
  %1508 = vmatpush2.msra.mxu0 0.0
  %1509 = vmatprep.subr.mxu0 0.0
  %1510 = vmatpush2.msra.mxu0 0.0
  %1511 = vmatprep.subr.mxu0 0.0
  %1512 = vmatpush2.msra.mxu0 0.0
  %1513 = vmatprep.subr.mxu0 0.0
  %1514 = vmatpush2.msra.mxu0 0.0
  %1515 = vmatprep.subr.mxu0 0.0
  %1516 = vmatpush2.msra.mxu0 0.0
  %1517 = vmatprep.subr.mxu0 0.0
  %1518 = vmatpush2.msra.mxu0 0.0
  %1519 = vmatprep.subr.mxu0 0.0
  %1520 = vmatpush2.msra.mxu0 0.0
  %1521 = vmatprep.subr.mxu0 0.0
  %1522 = vmatpush2.msra.mxu0 0.0
  %1523 = vmatprep.subr.mxu0 0.0
  %1524 = vmatpush2.msra.mxu0 0.0
  %1525 = vmatprep.mubr.f32.mxu0 0.0
  %1526 = vmatmul.mubr.f32.gmra.mxu0 %v1349
  %v1527 = vpop.f32.mrf.mxu0
  %v1528 = vadd.f32 %v1336, %v1527
  %v1529 = vpop.f32.mrf.mxu0
  %v1530 = vadd.f32 %v1336, %v1529
  %1531 = vmatprep.mubr.f32.mxu0 0.0
  %1532 = vmatmul.mubr.f32.gmra.mxu0 %v1352
  %v1533 = vpop.f32.mrf.mxu0
  %v1534 = vadd.f32 %v1341, %v1533
  %v1535 = vpop.f32.mrf.mxu0
  %v1536 = vadd.f32 %v1341, %v1535
  %1537 = vmatprep.mubr.f32.mxu0 0.0
  %1538 = vmatmul.mubr.f32.gmra.mxu0 %v1355
  %v1539 = vpop.f32.mrf.mxu0
  %v1540 = vadd.f32 %v1346, %v1539
  %v1541 = vpop.f32.mrf.mxu0
  %v1542 = vadd.f32 %v1346, %v1541
  %1543 = vdwg.mxu0
  %1544 = vmatprep.subr.mxu0 0.0
  %1545 = vmatpush1.msra.mxu0 0.0
  %1546 = vmatprep.subr.mxu0 0.0
  %1547 = vmatpush1.msra.mxu0 0.0
  %1548 = vmatprep.subr.mxu0 0.0
  %1549 = vmatpush1.msra.mxu0 0.0
  %1550 = vmatprep.subr.mxu0 0.0
  %1551 = vmatpush1.msra.mxu0 0.0
  %1552 = vmatprep.subr.mxu0 0.0
  %1553 = vmatpush1.msra.mxu0 0.0
  %1554 = vmatprep.subr.mxu0 0.0
  %1555 = vmatpush1.msra.mxu0 0.0
  %1556 = vmatprep.subr.mxu0 0.0
  %1557 = vmatpush1.msra.mxu0 0.0
  %1558 = vmatprep.subr.mxu0 0.0
  %1559 = vmatpush1.msra.mxu0 0.0
  %1560 = vmatprep.subr.mxu0 0.0
  %1561 = vmatpush1.msra.mxu0 0.0
  %1562 = vmatprep.subr.mxu0 0.0
  %1563 = vmatpush1.msra.mxu0 0.0
  %1564 = vmatprep.subr.mxu0 0.0
  %1565 = vmatpush1.msra.mxu0 0.0
  %1566 = vmatprep.subr.mxu0 0.0
  %1567 = vmatpush1.msra.mxu0 0.0
  %1568 = vmatprep.subr.mxu0 0.0
  %1569 = vmatpush1.msra.mxu0 0.0
  %1570 = vmatprep.subr.mxu0 %v1373
  %1571 = vmatpush1.msra.mxu0 %v1370
  %1572 = vmatprep.subr.mxu0 %v1318
  %1573 = vmatpush1.msra.mxu0 %v1317
  %1574 = vmatprep.subr.mxu0 %v1311
  %1575 = vmatpush1.msra.mxu0 %v1310
  %1576 = vmatprep.subr.mxu0 0.0
  %1577 = vmatpush2.msra.mxu0 0.0
  %1578 = vmatprep.subr.mxu0 0.0
  %1579 = vmatpush2.msra.mxu0 0.0
  %1580 = vmatprep.subr.mxu0 0.0
  %1581 = vmatpush2.msra.mxu0 0.0
  %1582 = vmatprep.subr.mxu0 0.0
  %1583 = vmatpush2.msra.mxu0 0.0
  %1584 = vmatprep.subr.mxu0 0.0
  %1585 = vmatpush2.msra.mxu0 0.0
  %1586 = vmatprep.subr.mxu0 0.0
  %1587 = vmatpush2.msra.mxu0 0.0
  %1588 = vmatprep.subr.mxu0 0.0
  %1589 = vmatpush2.msra.mxu0 0.0
  %1590 = vmatprep.subr.mxu0 0.0
  %1591 = vmatpush2.msra.mxu0 0.0
  %1592 = vmatprep.subr.mxu0 0.0
  %1593 = vmatpush2.msra.mxu0 0.0
  %1594 = vmatprep.subr.mxu0 0.0
  %1595 = vmatpush2.msra.mxu0 0.0
  %1596 = vmatprep.subr.mxu0 0.0
  %1597 = vmatpush2.msra.mxu0 0.0
  %1598 = vmatprep.subr.mxu0 0.0
  %1599 = vmatpush2.msra.mxu0 0.0
  %1600 = vmatprep.subr.mxu0 0.0
  %1601 = vmatpush2.msra.mxu0 0.0
  %1602 = vmatprep.subr.mxu0 0.0
  %1603 = vmatpush2.msra.mxu0 0.0
  %1604 = vmatprep.subr.mxu0 0.0
  %1605 = vmatpush2.msra.mxu0 0.0
  %1606 = vmatprep.subr.mxu0 0.0
  %1607 = vmatpush2.msra.mxu0 0.0
  %1608 = vmatprep.mubr.f32.mxu0 0.0
  %1609 = vmatmul.mubr.f32.gmra.mxu0 %v1349
  %v1610 = vpop.f32.mrf.mxu0
  %v1611 = vadd.f32 %v1336, %v1610
  %v1612 = vpop.f32.mrf.mxu0
  %v1613 = vadd.f32 %v1336, %v1612
  %1614 = vmatprep.mubr.f32.mxu0 0.0
  %1615 = vmatmul.mubr.f32.gmra.mxu0 %v1352
  %v1616 = vpop.f32.mrf.mxu0
  %v1617 = vadd.f32 %v1341, %v1616
  %v1618 = vpop.f32.mrf.mxu0
  %v1619 = vadd.f32 %v1341, %v1618
  %1620 = vmatprep.mubr.f32.mxu0 0.0
  %1621 = vmatmul.mubr.f32.gmra.mxu0 %v1355
  %v1622 = vpop.f32.mrf.mxu0
  %v1623 = vadd.f32 %v1346, %v1622
  %v1624 = vpop.f32.mrf.mxu0
  %v1625 = vadd.f32 %v1346, %v1624
  %1626 = vdwg.mxu0
  %1627 = vmatprep.subr.mxu0 0.0
  %1628 = vmatpush1.msra.mxu0 0.0
  %1629 = vmatprep.subr.mxu0 0.0
  %1630 = vmatpush1.msra.mxu0 0.0
  %1631 = vmatprep.subr.mxu0 0.0
  %1632 = vmatpush1.msra.mxu0 0.0
  %1633 = vmatprep.subr.mxu0 0.0
  %1634 = vmatpush1.msra.mxu0 0.0
  %1635 = vmatprep.subr.mxu0 0.0
  %1636 = vmatpush1.msra.mxu0 0.0
  %1637 = vmatprep.subr.mxu0 0.0
  %1638 = vmatpush1.msra.mxu0 0.0
  %1639 = vmatprep.subr.mxu0 0.0
  %1640 = vmatpush1.msra.mxu0 0.0
  %1641 = vmatprep.subr.mxu0 0.0
  %1642 = vmatpush1.msra.mxu0 0.0
  %1643 = vmatprep.subr.mxu0 0.0
  %1644 = vmatpush1.msra.mxu0 0.0
  %1645 = vmatprep.subr.mxu0 0.0
  %1646 = vmatpush1.msra.mxu0 0.0
  %1647 = vmatprep.subr.mxu0 0.0
  %1648 = vmatpush1.msra.mxu0 0.0
  %1649 = vmatprep.subr.mxu0 0.0
  %1650 = vmatpush1.msra.mxu0 0.0
  %1651 = vmatprep.subr.mxu0 0.0
  %1652 = vmatpush1.msra.mxu0 0.0
  %1653 = vmatprep.subr.mxu0 0.0
  %1654 = vmatpush1.msra.mxu0 %v1376
  %1655 = vmatprep.subr.mxu0 0.0
  %1656 = vmatpush1.msra.mxu0 %v1319
  %1657 = vmatprep.subr.mxu0 0.0
  %1658 = vmatpush1.msra.mxu0 %v1312
  %1659 = vmatprep.subr.mxu0 0.0
  %1660 = vmatpush2.msra.mxu0 0.0
  %1661 = vmatprep.subr.mxu0 0.0
  %1662 = vmatpush2.msra.mxu0 0.0
  %1663 = vmatprep.subr.mxu0 0.0
  %1664 = vmatpush2.msra.mxu0 0.0
  %1665 = vmatprep.subr.mxu0 0.0
  %1666 = vmatpush2.msra.mxu0 0.0
  %1667 = vmatprep.subr.mxu0 0.0
  %1668 = vmatpush2.msra.mxu0 0.0
  %1669 = vmatprep.subr.mxu0 0.0
  %1670 = vmatpush2.msra.mxu0 0.0
  %1671 = vmatprep.subr.mxu0 0.0
  %1672 = vmatpush2.msra.mxu0 0.0
  %1673 = vmatprep.subr.mxu0 0.0
  %1674 = vmatpush2.msra.mxu0 0.0
  %1675 = vmatprep.subr.mxu0 0.0
  %1676 = vmatpush2.msra.mxu0 0.0
  %1677 = vmatprep.subr.mxu0 0.0
  %1678 = vmatpush2.msra.mxu0 0.0
  %1679 = vmatprep.subr.mxu0 0.0
  %1680 = vmatpush2.msra.mxu0 0.0
  %1681 = vmatprep.subr.mxu0 0.0
  %1682 = vmatpush2.msra.mxu0 0.0
  %1683 = vmatprep.subr.mxu0 0.0
  %1684 = vmatpush2.msra.mxu0 0.0
  %1685 = vmatprep.subr.mxu0 0.0
  %1686 = vmatpush2.msra.mxu0 0.0
  %1687 = vmatprep.subr.mxu0 0.0
  %1688 = vmatpush2.msra.mxu0 0.0
  %1689 = vmatprep.subr.mxu0 0.0
  %1690 = vmatpush2.msra.mxu0 0.0
  %1691 = vmatprep.mubr.f32.mxu0 0.0
  %1692 = vmatmul.mubr.f32.gmra.mxu0 %v1349
  %v1693 = vpop.f32.mrf.mxu0
  %v1694 = vadd.f32 %v1336, %v1693
  %v1695 = vpop.f32.mrf.mxu0
  %1696 = vmatprep.mubr.f32.mxu0 0.0
  %1697 = vmatmul.mubr.f32.gmra.mxu0 %v1352
  %v1698 = vpop.f32.mrf.mxu0
  %v1699 = vadd.f32 %v1341, %v1698
  %v1700 = vpop.f32.mrf.mxu0
  %1701 = vmatprep.mubr.f32.mxu0 0.0
  %1702 = vmatmul.mubr.f32.gmra.mxu0 %v1355
  %v1703 = vpop.f32.mrf.mxu0
  %v1704 = vadd.f32 %v1346, %v1703
  %v1705 = vpop.f32.mrf.mxu0
  %1706 = vdwg.mxu0
  %1707 = vst [vmem:[%s9] sm:$0xff] %v1445
  %1708 = vst [vmem:[%s9 + $0x8] sm:$0xff] %v1447
  %1709 = vst [vmem:[%s9 + $0x10] sm:$0xff] %v1528
  %1710 = vst [vmem:[%s9 + $0x18] sm:$0xff] %v1530
  %1711 = vst [vmem:[%s9 + $0x20] sm:$0xff] %v1611
  %1712 = vst [vmem:[%s9 + $0x28] sm:$0xff] %v1613
  %1713 = vst [vmem:[%s9 + $0x30] sm:$0xff] %v1694
  %1714 = vst [vmem:[%s9 + $0x38] sm:$0xff] %v1451
  %1715 = vst [vmem:[%s9 + $0x40] sm:$0xff] %v1453
  %1716 = vst [vmem:[%s9 + $0x48] sm:$0xff] %v1534
  %1717 = vst [vmem:[%s9 + $0x50] sm:$0xff] %v1536
  %1718 = vst [vmem:[%s9 + $0x58] sm:$0xff] %v1617
  %1719 = vst [vmem:[%s9 + $0x60] sm:$0xff] %v1619
  %1720 = vst [vmem:[%s9 + $0x68] sm:$0xff] %v1699
  %1721 = vst [vmem:[%s9 + $0x70] sm:$0x1f] %v1457
  %1722 = vst [vmem:[%s9 + $0x78] sm:$0x1f] %v1459
  %1723 = vst [vmem:[%s9 + $0x80] sm:$0x1f] %v1540
  %1724 = vst [vmem:[%s9 + $0x88] sm:$0x1f] %v1542
  %1725 = vst [vmem:[%s9 + $0x90] sm:$0x1f] %v1623
  %1726 = vst [vmem:[%s9 + $0x98] sm:$0x1f] %v1625
  %1727 = vst [vmem:[%s9 + $0xa0] sm:$0x1f] %v1704
  // Predicated region
  $region38: #{model_forward.1} parent=0 // pred_check
    _
  $region39: #{model_forward.1} parent=0 // pred_check_branch
    %1729 = sbr.rel (0) target = $region41
  $region40: #{model_forward.1} parent=0 // pred_region
    _
  $region41: #{model_forward.1} parent=0 // pred_fallthru
    _
  // Predicated region
  $region42: #{model_forward.1} parent=0 // pred_check
    _
  $region43: #{model_forward.1} parent=0 // pred_check_branch
    %1731 = sbr.rel (0) target = $region45
  $region44: #{model_forward.1} parent=0 // pred_region
    _
  $region45: #{model_forward.1} parent=0 // pred_fallthru
    _

</llo_original>
